<compile_context>
chip_gen: v5e
topology: v5e:2x2
jax: 0.10.0
libtpu: 0.0.40
codegen_flags: <defaults>
</compile_context>

<pallas_src>
import functools

import numpy as np
import jax
import jax.numpy as jnp
from jax.experimental import pallas as pl
from jax.experimental.pallas import tpu as pltpu


def _pick_tile(dim, max_tile, multiple):
    """Largest t <= max_tile with dim % t == 0 and t % multiple == 0, else dim."""
    t = min(max_tile, dim)
    t -= t % multiple
    while t >= multiple:
        if dim % t == 0:
            return t
        t -= multiple
    return dim


def _vmem_limit():
    # ~48 MiB on v7x (64 MiB physical VMEM/TC), 64 MiB on v5e/v6e (128 MiB).
    try:
        cap = pltpu.get_tpu_info().vmem_capacity_bytes
    except Exception:
        cap = 128 * 1024 * 1024
    return min(64 * 1024 * 1024, (3 * cap) // 4)


# ---------------------------------------------------------------------------
# Kernel A1: norm1 + to_kv + k-normalization.  Grid: (b, n_pad // tn).
# Two variants: fused (d,2d) matmul for small d, split (d,d)+(d,d) for d>=256.
# ---------------------------------------------------------------------------
def _norm_kv_fused_kernel(x_ref, w1_ref, wkv_ref, kn_ref, v_ref):
    d = v_ref.shape[-1]
    x = x_ref[0].astype(jnp.float32)                      # (tn, d)
    mu = jnp.mean(x, axis=-1, keepdims=True)
    xc = x - mu
    var = jnp.mean(xc * xc, axis=-1, keepdims=True)
    xn = xc * jax.lax.rsqrt(var + 1e-6) * w1_ref[...]     # LayerNormWithoutBias
    kv = jnp.dot(xn.astype(jnp.bfloat16), wkv_ref[...],
                 preferred_element_type=jnp.float32)      # (tn, 2d), f32 acc
    k = kv[:, :d]
    v = kv[:, d:]
    kn = k * jax.lax.rsqrt(jnp.sum(k * k, axis=-1, keepdims=True) + 1e-12)
    kn_ref[0] = kn.astype(jnp.bfloat16)
    v_ref[0] = v.astype(jnp.bfloat16)


def _norm_kv_split_kernel(x_ref, w1_ref, wk_ref, wv_ref, kn_ref, v_ref):
    x = x_ref[0].astype(jnp.float32)                      # (tn, d)
    mu = jnp.mean(x, axis=-1, keepdims=True)
    xc = x - mu
    var = jnp.mean(xc * xc, axis=-1, keepdims=True)
    xn = (xc * jax.lax.rsqrt(var + 1e-6) * w1_ref[...]).astype(jnp.bfloat16)
    k = jnp.dot(xn, wk_ref[...], preferred_element_type=jnp.float32)
    v = jnp.dot(xn, wv_ref[...], preferred_element_type=jnp.float32)
    kn = k * jax.lax.rsqrt(jnp.sum(k * k, axis=-1, keepdims=True) + 1e-12)
    kn_ref[0] = kn.astype(jnp.bfloat16)
    v_ref[0] = v.astype(jnp.bfloat16)


# ---------------------------------------------------------------------------
# Kernel A2: cosine-similarity score tiles over upper-triangular tile pairs.
# Grid: (b, n_pairs); the (qi, kj) tile indices come from scalar-prefetched
# tables used directly in the index_maps -> below-diagonal tiles are never
# DMA'd, computed, or written back.
# ---------------------------------------------------------------------------
def _scores_kernel(qi_tab_ref, kj_tab_ref, knq_ref, knk_ref, s_ref):
    del qi_tab_ref, kj_tab_ref  # only consumed by the index_maps
    s_ref[0] = jax.lax.dot_general(
        knq_ref[0], knk_ref[0],
        dimension_numbers=(((1,), (1,)), ((), ())),   # contract last-with-last
        preferred_element_type=jnp.float32)


# ---------------------------------------------------------------------------
# Kernel B: (groups @ v) / size + norm2 + proj, reduction axis tiled last.
# Grid: (b, n_out // tm_b, n_pad // tkb); f32 accumulator scratch.
# ---------------------------------------------------------------------------
def _merge_norm_proj_kernel(g_ref, v_ref, sz_ref, w2_ref, wp_ref, y_ref, acc_ref):
    kk = pl.program_id(2)

    @pl.when(kk == 0)
    def _():
        acc_ref[...] = jnp.zeros_like(acc_ref)

    acc_ref[...] += jnp.dot(g_ref[0], v_ref[0],            # bf16 x bf16 -> f32
                            preferred_element_type=jnp.float32)

    @pl.when(kk == pl.num_programs(2) - 1)
    def _():
        inv = pl.reciprocal(sz_ref[0], approx=True)          # (tm_b, 1), EUP slot
        out = acc_ref[...] * inv                             # group mean
        mu = jnp.mean(out, axis=-1, keepdims=True)
        oc = out - mu
        var = jnp.mean(oc * oc, axis=-1, keepdims=True)
        on = oc * jax.lax.rsqrt(var + 1e-6) * w2_ref[...]
        y_ref[0] = jnp.dot(on.astype(jnp.bfloat16), wp_ref[...],
                           preferred_element_type=jnp.float32).astype(y_ref.dtype)


def geme_pooling(x, params, *, in_size, out_size):
    """x: [b, h, w, d] -> (y: [b, h_out, w_out, out_dim], token_sizes: [b, h_out, w_out])"""
    h, w = in_size
    h_out, w_out = out_size
    b = x.shape[0]
    d = x.shape[-1]
    n = h * w
    n_out_tok = h_out * w_out
    r = n - n_out_tok

    # Pad the token axis to a multiple of 128: all tiles become lane/sublane
    # dense (no vst.msk) and the triangular tile skip never degenerates.
    n_pad = ((n + 127) // 128) * 128

    x3 = x.reshape(b, n, d)
    if n_pad != n:
        x3 = jnp.pad(x3, ((0, 0), (0, n_pad - n), (0, 0)))   # zero rows -> kn=v=0

    w1 = params["norm1_w"].reshape(1, d).astype(jnp.float32)
    wkv = params["w_kv"].astype(jnp.bfloat16)                 # (d, 2d)
    w2 = params["norm2_w"].reshape(1, d).astype(jnp.float32)
    wp = params["wproj"].astype(jnp.bfloat16)                 # (d, out_dim)
    out_dim = params["wproj"].shape[1]

    vmem_lim = _vmem_limit()

    # ---- Kernel A1: norm1 + kv projection + k normalization ----
    tn = _pick_tile(n_pad, 512, 128)
    a1_out_shape = (jax.ShapeDtypeStruct((b, n_pad, d), jnp.bfloat16),
                    jax.ShapeDtypeStruct((b, n_pad, d), jnp.bfloat16))
    a1_out_specs = (pl.BlockSpec((1, tn, d), lambda i, j: (i, j, 0)),
                    pl.BlockSpec((1, tn, d), lambda i, j: (i, j, 0)))
    a1_x_spec = pl.BlockSpec((1, tn, d), lambda i, j: (i, j, 0))
    a1_w1_spec = pl.BlockSpec((1, d), lambda i, j: (0, 0))
    a1_cparams = pltpu.CompilerParams(
        dimension_semantics=("parallel", "parallel"),
        vmem_limit_bytes=vmem_lim)
    if d >= 256:
        wk = wkv[:, :d]
        wv = wkv[:, d:]
        kn, v = pl.pallas_call(
            _norm_kv_split_kernel,
            out_shape=a1_out_shape,
            grid=(b, n_pad // tn),
            in_specs=[a1_x_spec, a1_w1_spec,
                      pl.BlockSpec((d, d), lambda i, j: (0, 0)),
                      pl.BlockSpec((d, d), lambda i, j: (0, 0))],
            out_specs=a1_out_specs,
            compiler_params=a1_cparams,
        )(x3, w1, wk, wv)
    else:
        kn, v = pl.pallas_call(
            _norm_kv_fused_kernel,
            out_shape=a1_out_shape,
            grid=(b, n_pad // tn),
            in_specs=[a1_x_spec, a1_w1_spec,
                      pl.BlockSpec((d, 2 * d), lambda i, j: (0, 0))],
            out_specs=a1_out_specs,
            compiler_params=a1_cparams,
        )(x3, w1, wkv)

    # ---- Kernel A2: upper-triangular score tiles via scalar-prefetched table ----
    tq = _pick_tile(n_pad, 1024, 128)     # taller q tile: halves knk re-reads
    tk_s = _pick_tile(n_pad, 256, 128)    # lane-dense score stores
    nq, nk = n_pad // tq, n_pad // tk_s
    # Static tile-pair table: only tiles containing some (i, j) with j > i,
    # row-major in qi so the resident kn q-tile is reused across kj.
    pairs = [(qi, kj) for qi in range(nq) for kj in range(nk)
             if kj * tk_s + tk_s - 1 > qi * tq]
    qi_tab = jnp.asarray(np.array([p[0] for p in pairs], dtype=np.int32))
    kj_tab = jnp.asarray(np.array([p[1] for p in pairs], dtype=np.int32))
    n_pairs = len(pairs)

    # Below-diagonal output tiles are never written (uninitialized); downstream
    # only gathers strictly-upper-triangle entries of the first n rows/cols.
    # Scores kept f32 (not bf16) to preserve argsort tie-breaking semantics.
    scores_full = pl.pallas_call(
        _scores_kernel,
        out_shape=jax.ShapeDtypeStruct((b, n_pad, n_pad), jnp.float32),
        grid_spec=pltpu.PrefetchScalarGridSpec(
            num_scalar_prefetch=2,
            grid=(b, n_pairs),
            in_specs=[
                pl.BlockSpec((1, tq, d), lambda bi, p, qt, kt: (bi, qt[p], 0)),
                pl.BlockSpec((1, tk_s, d), lambda bi, p, qt, kt: (bi, kt[p], 0)),
            ],
            out_specs=pl.BlockSpec(
                (1, tq, tk_s), lambda bi, p, qt, kt: (bi, qt[p], kt[p])),
        ),
        compiler_params=pltpu.CompilerParams(
            dimension_semantics=("parallel", "parallel"),
            vmem_limit_bytes=vmem_lim),
    )(qi_tab, kj_tab, kn, kn)

    # ---- GreedyMerging: sequential, data-dependent loop (plain JAX glue) ----
    # TODO(synk): the greedy merge loop is inherently sequential argmax/scatter
    # control flow (and the n^2 triu gather/argsort may dominate wall time);
    # kept in lax.fori_loop rather than a Pallas kernel.
    ii, jj = jnp.triu_indices(n, k=1)
    triu_ids = (ii * n_pad + jj).astype(jnp.int32)                # flat ids in padded layout
    triu_ijs = jnp.stack([ii, jj], axis=-1).astype(jnp.int32)     # [M, 2]
    M = triu_ids.shape[0]

    scores = scores_full.reshape(b, n_pad * n_pad)[:, triu_ids]          # [b, M]
    sort_scores = jnp.argsort(scores, axis=-1, descending=True)          # [b, M]
    sorted_ijs = triu_ijs[sort_scores]                                   # [b, M, 2]

    b_rge = jnp.arange(b)

    def body(_, carry):
        sorted_masks, groups, group_ids = carry
        idx = jnp.argmax(sorted_masks, axis=1)            # first still-valid pair
        ij = sorted_ijs[b_rge, idx]                       # [b, 2]
        i0, j0 = ij[:, 0], ij[:, 1]
        i = group_ids[b_rge, i0]                          # current group reps
        j = group_ids[b_rge, j0]
        group_i = groups[b_rge, i]                        # [b, n] bool
        new_j = groups[b_rge, j] | group_i
        groups = groups.at[b_rge, j].set(new_j)
        group_ids = jnp.where(group_i, j[:, None], group_ids)
        groups = groups.at[b_rge, i].set(False)
        edges = new_j[:, :, None] & new_j[:, None, :]     # [b, n, n]
        edges_triu = edges.reshape(b, n * n)[:, (ii * n + jj).astype(jnp.int32)]
        edges_sorted = jnp.take_along_axis(edges_triu, sort_scores, axis=1)
        sorted_masks = sorted_masks & jnp.logical_not(edges_sorted)
        return sorted_masks, groups, group_ids

    sorted_masks0 = jnp.ones((b, M), dtype=bool)
    groups0 = jnp.tile(jnp.eye(n, dtype=bool)[None], (b, 1, 1))
    group_ids0 = jnp.tile(jnp.arange(n, dtype=jnp.int32)[None], (b, 1))
    _, groups, _ = jax.lax.fori_loop(0, r, body,
                                     (sorted_masks0, groups0, group_ids0))

    # drop empty groups (exactly r per batch), preserving row order
    nonempty = groups.sum(-1) > 0                                        # [b, n]
    order = jnp.argsort(jnp.logical_not(nonempty), axis=-1, stable=True)
    sel = order[:, :n_out_tok]                                           # [b, n_out]
    groups_sel = jnp.take_along_axis(groups, sel[:, :, None], axis=1)    # [b, n_out, n] bool
    group_sizes = groups_sel.sum(-1).astype(jnp.int32)                   # [b, n_out]

    groups_bf16 = groups_sel.astype(jnp.bfloat16)                        # 0/1 weights
    if n_pad != n:
        groups_bf16 = jnp.pad(groups_bf16, ((0, 0), (0, 0), (0, n_pad - n)))
    sizes_f32 = group_sizes.astype(jnp.float32)[..., None]               # [b, n_out, 1]

    # ---- Kernel B: weighted merge (tiled over n_pad) + norm2 + proj ----
    tkb = _pick_tile(n_pad, 512, 128)
    tm_b = _pick_tile(n_out_tok, 256, 8)   # extra parallel axis for megacore use
    y = pl.pallas_call(
        _merge_norm_proj_kernel,
        out_shape=jax.ShapeDtypeStruct((b, n_out_tok, out_dim), jnp.float32),
        grid=(b, n_out_tok // tm_b, n_pad // tkb),
        in_specs=[
            pl.BlockSpec((1, tm_b, tkb), lambda i, m, k: (i, m, k)),
            pl.BlockSpec((1, tkb, d), lambda i, m, k: (i, k, 0)),
            pl.BlockSpec((1, tm_b, 1), lambda i, m, k: (i, m, 0)),
            pl.BlockSpec((1, d), lambda i, m, k: (0, 0)),
            pl.BlockSpec((d, out_dim), lambda i, m, k: (0, 0)),
        ],
        out_specs=pl.BlockSpec((1, tm_b, out_dim), lambda i, m, k: (i, m, 0)),
        scratch_shapes=[pltpu.VMEM((tm_b, d), jnp.float32)],
        compiler_params=pltpu.CompilerParams(
            dimension_semantics=("parallel", "parallel", "arbitrary"),
            vmem_limit_bytes=vmem_lim),
    )(groups_bf16, v, sizes_f32, w2, wp)

    y = y.reshape(b, h_out, w_out, out_dim)
    token_sizes = group_sizes.reshape(b, h_out, w_out)
    return y, token_sizes


if __name__ == "__main__":
    key = jax.random.PRNGKey(0)
    b, in_dim, out_dim = 2, 16, 32
    in_size, out_size = (4, 4), (2, 2)

    kx, k1, k2 = jax.random.split(key, 3)
    x = jax.random.normal(kx, (b, in_size[0], in_size[1], in_dim), dtype=jnp.float32)

    # deterministic synthetic parameters (shapes from the module __init__)
    params = {
        "norm1_w": jnp.ones((in_dim,), jnp.float32),                    # LayerNormWithoutBias weight
        "w_kv": jax.random.normal(k1, (in_dim, 2 * in_dim), jnp.float32)
                / jnp.sqrt(in_dim),                                     # to_kv weight (k half | v half)
        "norm2_w": jnp.ones((in_dim,), jnp.float32),
        "wproj": jax.random.normal(k2, (in_dim, out_dim), jnp.float32)
                 / jnp.sqrt(in_dim),                                    # proj weight
    }

    fn = jax.jit(functools.partial(geme_pooling, in_size=in_size, out_size=out_size))
    y, token_sizes = fn(x, params)
    jax.block_until_ready((y, token_sizes))

    assert y.shape == (b, out_size[0], out_size[1], out_dim), y.shape
    assert token_sizes.shape == (b, out_size[0], out_size[1]), token_sizes.shape
    assert int(token_sizes.sum()) == b * in_size[0] * in_size[1]  # merged tokens cover all inputs
    assert bool(jnp.all(jnp.isfinite(y)))
    print("KERNEL_OK")
</pallas_src>

<mosaic_0001>
module attributes {stable_mosaic.version = 11 : i64} {
  func.func @_norm_kv_fused_kernel(%arg0: i32, %arg1: i32, %arg2: memref<1x128x16xf32, #tpu.memory_space<vmem>>, %arg3: memref<1x16xf32, #tpu.memory_space<vmem>>, %arg4: memref<16x32xbf16, #tpu.memory_space<vmem>>, %arg5: memref<1x128x16xbf16, #tpu.memory_space<vmem>>, %arg6: memref<1x128x16xbf16, #tpu.memory_space<vmem>>) attributes {dimension_semantics = [#tpu.dimension_semantics<parallel>, #tpu.dimension_semantics<parallel>], iteration_bounds = array<i64: 2, 1>, scalar_prefetch = 0 : i64, scratch_operands = 0 : i64, tpu.core_type = #tpu.core_type<tc>, window_params = [{transform_indices = @transform_0, window_bounds = array<i64: 1, 128, 16>}, {pipeline_mode = #tpu.pipeline_mode<synchronous>, transform_indices = @transform_1, window_bounds = array<i64: 1, 16>}, {pipeline_mode = #tpu.pipeline_mode<synchronous>, transform_indices = @transform_2, window_bounds = array<i64: 16, 32>}, {transform_indices = @transform_3, window_bounds = array<i64: 1, 128, 16>}, {transform_indices = @transform_4, window_bounds = array<i64: 1, 128, 16>}]} {
    %c0 = arith.constant 0 : index
    %c0_0 = arith.constant 0 : index
    %c0_1 = arith.constant 0 : index
    %0 = vector.load %arg2[%c0, %c0_0, %c0_1] : memref<1x128x16xf32, #tpu.memory_space<vmem>>, vector<1x128x16xf32>
    %1 = vector.shape_cast %0 : vector<1x128x16xf32> to vector<128x16xf32>
    %cst = arith.constant dense<0.000000e+00> : vector<128xf32>
    %2 = vector.multi_reduction <add>, %1, %cst [1] : vector<128x16xf32> to vector<128xf32>
    %3 = vector.shape_cast %2 : vector<128xf32> to vector<128x1xf32>
    %cst_2 = arith.constant 1.600000e+01 : f32
    %4 = vector.broadcast %cst_2 : f32 to vector<128x1xf32>
    %5 = arith.divf %3, %4 : vector<128x1xf32>
    %6 = vector.broadcast %5 : vector<128x1xf32> to vector<128x16xf32>
    %7 = arith.subf %1, %6 : vector<128x16xf32>
    %8 = arith.mulf %7, %7 : vector<128x16xf32>
    %cst_3 = arith.constant dense<0.000000e+00> : vector<128xf32>
    %9 = vector.multi_reduction <add>, %8, %cst_3 [1] : vector<128x16xf32> to vector<128xf32>
    %10 = vector.shape_cast %9 : vector<128xf32> to vector<128x1xf32>
    %cst_4 = arith.constant 1.600000e+01 : f32
    %11 = vector.broadcast %cst_4 : f32 to vector<128x1xf32>
    %12 = arith.divf %10, %11 : vector<128x1xf32>
    %cst_5 = arith.constant 9.99999997E-7 : f32
    %13 = vector.broadcast %cst_5 : f32 to vector<128x1xf32>
    %14 = arith.addf %12, %13 : vector<128x1xf32>
    %15 = math.rsqrt %14 : vector<128x1xf32>
    %16 = vector.broadcast %15 : vector<128x1xf32> to vector<128x16xf32>
    %17 = arith.mulf %7, %16 : vector<128x16xf32>
    %c0_6 = arith.constant 0 : index
    %c0_7 = arith.constant 0 : index
    %18 = vector.load %arg3[%c0_6, %c0_7] : memref<1x16xf32, #tpu.memory_space<vmem>>, vector<1x16xf32>
    %19 = vector.broadcast %18 : vector<1x16xf32> to vector<128x16xf32>
    %20 = arith.mulf %17, %19 : vector<128x16xf32>
    %21 = arith.truncf %20 : vector<128x16xf32> to vector<128x16xbf16>
    %c0_8 = arith.constant 0 : index
    %c0_9 = arith.constant 0 : index
    %22 = vector.load %arg4[%c0_8, %c0_9] : memref<16x32xbf16, #tpu.memory_space<vmem>>, vector<16x32xbf16>
    %cst_10 = arith.constant dense<0.000000e+00> : vector<128x32xf32>
    %23 = tpu.matmul %21, %22, %cst_10 {dimension_numbers = #tpu.dot_dimension_numbers<[1], [0], [0], [1], [0, 0, 1, 1], [], []>} : vector<128x16xbf16>, vector<16x32xbf16>, vector<128x32xf32> -> vector<128x32xf32>
    %24 = vector.extract_strided_slice %23 {offsets = [0, 0], sizes = [128, 16], strides = [1, 1]} : vector<128x32xf32> to vector<128x16xf32>
    %25 = vector.extract_strided_slice %23 {offsets = [0, 16], sizes = [128, 16], strides = [1, 1]} : vector<128x32xf32> to vector<128x16xf32>
    %26 = arith.mulf %24, %24 : vector<128x16xf32>
    %cst_11 = arith.constant dense<0.000000e+00> : vector<128xf32>
    %27 = vector.multi_reduction <add>, %26, %cst_11 [1] : vector<128x16xf32> to vector<128xf32>
    %28 = vector.shape_cast %27 : vector<128xf32> to vector<128x1xf32>
    %cst_12 = arith.constant 9.99999996E-13 : f32
    %29 = vector.broadcast %cst_12 : f32 to vector<128x1xf32>
    %30 = arith.addf %28, %29 : vector<128x1xf32>
    %31 = math.rsqrt %30 : vector<128x1xf32>
    %32 = vector.broadcast %31 : vector<128x1xf32> to vector<128x16xf32>
    %33 = arith.mulf %24, %32 : vector<128x16xf32>
    %34 = arith.truncf %33 : vector<128x16xf32> to vector<128x16xbf16>
    %c0_13 = arith.constant 0 : index
    %c0_14 = arith.constant 0 : index
    %c0_15 = arith.constant 0 : index
    %35 = vector.load %arg5[%c0_13, %c0_14, %c0_15] : memref<1x128x16xbf16, #tpu.memory_space<vmem>>, vector<1x128x16xbf16>
    %36 = vector.shape_cast %35 : vector<1x128x16xbf16> to vector<128x16xbf16>
    %37 = vector.shape_cast %34 : vector<128x16xbf16> to vector<1x128x16xbf16>
    tpu.vector_store %arg5[%c0_13, %c0_14, %c0_15], %37 {strides = array<i32>} : memref<1x128x16xbf16, #tpu.memory_space<vmem>>, vector<1x128x16xbf16>,
    %38 = arith.truncf %25 : vector<128x16xf32> to vector<128x16xbf16>
    %c0_16 = arith.constant 0 : index
    %c0_17 = arith.constant 0 : index
    %c0_18 = arith.constant 0 : index
    %39 = vector.load %arg6[%c0_16, %c0_17, %c0_18] : memref<1x128x16xbf16, #tpu.memory_space<vmem>>, vector<1x128x16xbf16>
    %40 = vector.shape_cast %39 : vector<1x128x16xbf16> to vector<128x16xbf16>
    %41 = vector.shape_cast %38 : vector<128x16xbf16> to vector<1x128x16xbf16>
    tpu.vector_store %arg6[%c0_16, %c0_17, %c0_18], %41 {strides = array<i32>} : memref<1x128x16xbf16, #tpu.memory_space<vmem>>, vector<1x128x16xbf16>,
    return
  }
  func.func @transform_0(%arg0: i32, %arg1: i32) -> (i32, i32, i32) {
    %c0_i32 = arith.constant 0 : i32
    %c0_i32_0 = arith.constant 0 : i32
    return %arg0, %arg1, %c0_i32 : i32, i32, i32
  }
  func.func @transform_1(%arg0: i32, %arg1: i32) -> (i32, i32) {
    %c0_i32 = arith.constant 0 : i32
    %c0_i32_0 = arith.constant 0 : i32
    %c0_i32_1 = arith.constant 0 : i32
    return %c0_i32, %c0_i32_0 : i32, i32
  }
  func.func @transform_2(%arg0: i32, %arg1: i32) -> (i32, i32) {
    %c0_i32 = arith.constant 0 : i32
    %c0_i32_0 = arith.constant 0 : i32
    %c0_i32_1 = arith.constant 0 : i32
    return %c0_i32, %c0_i32_0 : i32, i32
  }
  func.func @transform_3(%arg0: i32, %arg1: i32) -> (i32, i32, i32) {
    %c0_i32 = arith.constant 0 : i32
    %c0_i32_0 = arith.constant 0 : i32
    return %arg0, %arg1, %c0_i32 : i32, i32, i32
  }
  func.func @transform_4(%arg0: i32, %arg1: i32) -> (i32, i32, i32) {
    %c0_i32 = arith.constant 0 : i32
    %c0_i32_0 = arith.constant 0 : i32
    return %arg0, %arg1, %c0_i32 : i32, i32, i32
  }
}

module attributes {stable_mosaic.version = 11 : i64} {
  func.func @_scores_kernel(%arg0: i32, %arg1: i32, %arg2: memref<1xi32, #tpu.memory_space<smem>>, %arg3: memref<1xi32, #tpu.memory_space<smem>>, %arg4: memref<1x128x16xbf16, #tpu.memory_space<vmem>>, %arg5: memref<1x128x16xbf16, #tpu.memory_space<vmem>>, %arg6: memref<1x128x128xf32, #tpu.memory_space<vmem>>) attributes {dimension_semantics = [#tpu.dimension_semantics<parallel>, #tpu.dimension_semantics<parallel>], iteration_bounds = array<i64: 2, 1>, scalar_prefetch = 2 : i64, scratch_operands = 0 : i64, tpu.core_type = #tpu.core_type<tc>, window_params = [{transform_indices = @transform_0, window_bounds = array<i64: 1, 128, 16>}, {transform_indices = @transform_1, window_bounds = array<i64: 1, 128, 16>}, {transform_indices = @transform_2, window_bounds = array<i64: 1, 128, 128>}]} {
    %c0 = arith.constant 0 : index
    %c0_0 = arith.constant 0 : index
    %c0_1 = arith.constant 0 : index
    %0 = vector.load %arg4[%c0, %c0_0, %c0_1] : memref<1x128x16xbf16, #tpu.memory_space<vmem>>, vector<1x128x16xbf16>
    %1 = vector.shape_cast %0 : vector<1x128x16xbf16> to vector<128x16xbf16>
    %c0_2 = arith.constant 0 : index
    %c0_3 = arith.constant 0 : index
    %c0_4 = arith.constant 0 : index
    %2 = vector.load %arg5[%c0_2, %c0_3, %c0_4] : memref<1x128x16xbf16, #tpu.memory_space<vmem>>, vector<1x128x16xbf16>
    %3 = vector.shape_cast %2 : vector<1x128x16xbf16> to vector<128x16xbf16>
    %cst = arith.constant dense<0.000000e+00> : vector<128x128xf32>
    %4 = tpu.matmul %1, %3, %cst {dimension_numbers = #tpu.dot_dimension_numbers<[1], [1], [0], [0], [0, 0, 1, 0], [], []>} : vector<128x16xbf16>, vector<128x16xbf16>, vector<128x128xf32> -> vector<128x128xf32>
    %c0_5 = arith.constant 0 : index
    %c0_6 = arith.constant 0 : index
    %c0_7 = arith.constant 0 : index
    %5 = vector.load %arg6[%c0_5, %c0_6, %c0_7] : memref<1x128x128xf32, #tpu.memory_space<vmem>>, vector<1x128x128xf32>
    %6 = vector.shape_cast %5 : vector<1x128x128xf32> to vector<128x128xf32>
    %7 = vector.shape_cast %4 : vector<128x128xf32> to vector<1x128x128xf32>
    tpu.vector_store %arg6[%c0_5, %c0_6, %c0_7], %7 {strides = array<i32>} : memref<1x128x128xf32, #tpu.memory_space<vmem>>, vector<1x128x128xf32>,
    return
  }
  func.func @transform_0(%arg0: i32, %arg1: i32, %arg2: memref<1xi32, #tpu.memory_space<smem>>, %arg3: memref<1xi32, #tpu.memory_space<smem>>) -> (i32, i32, i32) {
    %0 = arith.index_cast %arg1 : i32 to index
    %1 = memref.load %arg2[%0] : memref<1xi32, #tpu.memory_space<smem>>
    %c0_i32 = arith.constant 0 : i32
    %c0_i32_0 = arith.constant 0 : i32
    return %arg0, %1, %c0_i32 : i32, i32, i32
  }
  func.func @transform_1(%arg0: i32, %arg1: i32, %arg2: memref<1xi32, #tpu.memory_space<smem>>, %arg3: memref<1xi32, #tpu.memory_space<smem>>) -> (i32, i32, i32) {
    %0 = arith.index_cast %arg1 : i32 to index
    %1 = memref.load %arg3[%0] : memref<1xi32, #tpu.memory_space<smem>>
    %c0_i32 = arith.constant 0 : i32
    %c0_i32_0 = arith.constant 0 : i32
    return %arg0, %1, %c0_i32 : i32, i32, i32
  }
  func.func @transform_2(%arg0: i32, %arg1: i32, %arg2: memref<1xi32, #tpu.memory_space<smem>>, %arg3: memref<1xi32, #tpu.memory_space<smem>>) -> (i32, i32, i32) {
    %0 = arith.index_cast %arg1 : i32 to index
    %1 = memref.load %arg2[%0] : memref<1xi32, #tpu.memory_space<smem>>
    %2 = arith.index_cast %arg1 : i32 to index
    %3 = memref.load %arg3[%2] : memref<1xi32, #tpu.memory_space<smem>>
    %c0_i32 = arith.constant 0 : i32
    return %arg0, %1, %3 : i32, i32, i32
  }
}

module attributes {stable_mosaic.version = 11 : i64} {
  func.func @_merge_norm_proj_kernel(%arg0: i32, %arg1: i32, %arg2: i32, %arg3: memref<1x4x128xbf16, #tpu.memory_space<vmem>>, %arg4: memref<1x128x16xbf16, #tpu.memory_space<vmem>>, %arg5: memref<1x4x1xf32, #tpu.memory_space<vmem>>, %arg6: memref<1x16xf32, #tpu.memory_space<vmem>>, %arg7: memref<16x32xbf16, #tpu.memory_space<vmem>>, %arg8: memref<1x4x32xf32, #tpu.memory_space<vmem>>, %arg9: memref<4x16xf32, #tpu.memory_space<vmem>>) attributes {dimension_semantics = [#tpu.dimension_semantics<parallel>, #tpu.dimension_semantics<parallel>, #tpu.dimension_semantics<arbitrary>], iteration_bounds = array<i64: 2, 1, 1>, scalar_prefetch = 0 : i64, scratch_operands = 1 : i64, tpu.core_type = #tpu.core_type<tc>, window_params = [{transform_indices = @transform_0, window_bounds = array<i64: 1, 4, 128>}, {transform_indices = @transform_1, window_bounds = array<i64: 1, 128, 16>}, {transform_indices = @transform_2, window_bounds = array<i64: 1, 4, 1>}, {pipeline_mode = #tpu.pipeline_mode<synchronous>, transform_indices = @transform_3, window_bounds = array<i64: 1, 16>}, {pipeline_mode = #tpu.pipeline_mode<synchronous>, transform_indices = @transform_4, window_bounds = array<i64: 16, 32>}, {transform_indices = @transform_5, window_bounds = array<i64: 1, 4, 32>}]} {
    %c0_i32 = arith.constant 0 : i32
    %0 = arith.cmpi eq, %arg2, %c0_i32 : i32
    %1 = arith.extui %0 : i1 to i32
    %c0_i32_0 = arith.constant 0 : i32
    %2 = arith.cmpi ne, %1, %c0_i32_0 : i32
    scf.if %2 {
      %cst_12 = arith.constant 0.000000e+00 : f32
      %14 = vector.broadcast %cst_12 : f32 to vector<4x16xf32>
      %c0_13 = arith.constant 0 : index
      %c0_14 = arith.constant 0 : index
      %15 = vector.load %arg9[%c0_13, %c0_14] : memref<4x16xf32, #tpu.memory_space<vmem>>, vector<4x16xf32>
      tpu.vector_store %arg9[%c0_13, %c0_14], %14 {strides = array<i32>} : memref<4x16xf32, #tpu.memory_space<vmem>>, vector<4x16xf32>,
    } else {
    }
    %c0 = arith.constant 0 : index
    %c0_1 = arith.constant 0 : index
    %3 = vector.load %arg9[%c0, %c0_1] : memref<4x16xf32, #tpu.memory_space<vmem>>, vector<4x16xf32>
    %c0_2 = arith.constant 0 : index
    %c0_3 = arith.constant 0 : index
    %c0_4 = arith.constant 0 : index
    %4 = vector.load %arg3[%c0_2, %c0_3, %c0_4] : memref<1x4x128xbf16, #tpu.memory_space<vmem>>, vector<1x4x128xbf16>
    %5 = vector.shape_cast %4 : vector<1x4x128xbf16> to vector<4x128xbf16>
    %c0_5 = arith.constant 0 : index
    %c0_6 = arith.constant 0 : index
    %c0_7 = arith.constant 0 : index
    %6 = vector.load %arg4[%c0_5, %c0_6, %c0_7] : memref<1x128x16xbf16, #tpu.memory_space<vmem>>, vector<1x128x16xbf16>
    %7 = vector.shape_cast %6 : vector<1x128x16xbf16> to vector<128x16xbf16>
    %cst = arith.constant dense<0.000000e+00> : vector<4x16xf32>
    %8 = tpu.matmul %5, %7, %cst {dimension_numbers = #tpu.dot_dimension_numbers<[1], [0], [0], [1], [0, 0, 1, 1], [], []>} : vector<4x128xbf16>, vector<128x16xbf16>, vector<4x16xf32> -> vector<4x16xf32>
    %9 = arith.addf %3, %8 : vector<4x16xf32>
    %c0_8 = arith.constant 0 : index
    %c0_9 = arith.constant 0 : index
    %10 = vector.load %arg9[%c0_8, %c0_9] : memref<4x16xf32, #tpu.memory_space<vmem>>, vector<4x16xf32>
    tpu.vector_store %arg9[%c0_8, %c0_9], %9 {strides = array<i32>} : memref<4x16xf32, #tpu.memory_space<vmem>>, vector<4x16xf32>,
    %c0_i32_10 = arith.constant 0 : i32
    %11 = arith.cmpi eq, %arg2, %c0_i32_10 : i32
    %12 = arith.extui %11 : i1 to i32
    %c0_i32_11 = arith.constant 0 : i32
    %13 = arith.cmpi ne, %12, %c0_i32_11 : i32
    scf.if %13 {
      %c0_12 = arith.constant 0 : index
      %c0_13 = arith.constant 0 : index
      %c0_14 = arith.constant 0 : index
      %14 = vector.load %arg5[%c0_12, %c0_13, %c0_14] : memref<1x4x1xf32, #tpu.memory_space<vmem>>, vector<1x4x1xf32>
      %15 = vector.shape_cast %14 : vector<1x4x1xf32> to vector<4x1xf32>
      %16 = tpu.reciprocal %15 {approx = true} : vector<4x1xf32> -> vector<4x1xf32>
      %c0_15 = arith.constant 0 : index
      %c0_16 = arith.constant 0 : index
      %17 = vector.load %arg9[%c0_15, %c0_16] : memref<4x16xf32, #tpu.memory_space<vmem>>, vector<4x16xf32>
      %18 = vector.broadcast %16 : vector<4x1xf32> to vector<4x16xf32>
      %19 = arith.mulf %17, %18 : vector<4x16xf32>
      %cst_17 = arith.constant dense<0.000000e+00> : vector<4xf32>
      %20 = vector.multi_reduction <add>, %19, %cst_17 [1] : vector<4x16xf32> to vector<4xf32>
      %21 = vector.shape_cast %20 : vector<4xf32> to vector<4x1xf32>
      %cst_18 = arith.constant 1.600000e+01 : f32
      %22 = vector.broadcast %cst_18 : f32 to vector<4x1xf32>
      %23 = arith.divf %21, %22 : vector<4x1xf32>
      %24 = vector.broadcast %23 : vector<4x1xf32> to vector<4x16xf32>
      %25 = arith.subf %19, %24 : vector<4x16xf32>
      %26 = arith.mulf %25, %25 : vector<4x16xf32>
      %cst_19 = arith.constant dense<0.000000e+00> : vector<4xf32>
      %27 = vector.multi_reduction <add>, %26, %cst_19 [1] : vector<4x16xf32> to vector<4xf32>
      %28 = vector.shape_cast %27 : vector<4xf32> to vector<4x1xf32>
      %cst_20 = arith.constant 1.600000e+01 : f32
      %29 = vector.broadcast %cst_20 : f32 to vector<4x1xf32>
      %30 = arith.divf %28, %29 : vector<4x1xf32>
      %cst_21 = arith.constant 9.99999997E-7 : f32
      %31 = vector.broadcast %cst_21 : f32 to vector<4x1xf32>
      %32 = arith.addf %30, %31 : vector<4x1xf32>
      %33 = math.rsqrt %32 : vector<4x1xf32>
      %34 = vector.broadcast %33 : vector<4x1xf32> to vector<4x16xf32>
      %35 = arith.mulf %25, %34 : vector<4x16xf32>
      %c0_22 = arith.constant 0 : index
      %c0_23 = arith.constant 0 : index
      %36 = vector.load %arg6[%c0_22, %c0_23] : memref<1x16xf32, #tpu.memory_space<vmem>>, vector<1x16xf32>
      %37 = vector.broadcast %36 : vector<1x16xf32> to vector<4x16xf32>
      %38 = arith.mulf %35, %37 : vector<4x16xf32>
      %39 = arith.truncf %38 : vector<4x16xf32> to vector<4x16xbf16>
      %c0_24 = arith.constant 0 : index
      %c0_25 = arith.constant 0 : index
      %40 = vector.load %arg7[%c0_24, %c0_25] : memref<16x32xbf16, #tpu.memory_space<vmem>>, vector<16x32xbf16>
      %cst_26 = arith.constant dense<0.000000e+00> : vector<4x32xf32>
      %41 = tpu.matmul %39, %40, %cst_26 {dimension_numbers = #tpu.dot_dimension_numbers<[1], [0], [0], [1], [0, 0, 1, 1], [], []>} : vector<4x16xbf16>, vector<16x32xbf16>, vector<4x32xf32> -> vector<4x32xf32>
      %c0_27 = arith.constant 0 : index
      %c0_28 = arith.constant 0 : index
      %c0_29 = arith.constant 0 : index
      %42 = vector.load %arg8[%c0_27, %c0_28, %c0_29] : memref<1x4x32xf32, #tpu.memory_space<vmem>>, vector<1x4x32xf32>
      %43 = vector.shape_cast %42 : vector<1x4x32xf32> to vector<4x32xf32>
      %44 = vector.shape_cast %41 : vector<4x32xf32> to vector<1x4x32xf32>
      tpu.vector_store %arg8[%c0_27, %c0_28, %c0_29], %44 {strides = array<i32>} : memref<1x4x32xf32, #tpu.memory_space<vmem>>, vector<1x4x32xf32>,
    } else {
    }
    return
  }
  func.func @transform_0(%arg0: i32, %arg1: i32, %arg2: i32) -> (i32, i32, i32) {
    %c0_i32 = arith.constant 0 : i32
    return %arg0, %arg1, %arg2 : i32, i32, i32
  }
  func.func @transform_1(%arg0: i32, %arg1: i32, %arg2: i32) -> (i32, i32, i32) {
    %c0_i32 = arith.constant 0 : i32
    %c0_i32_0 = arith.constant 0 : i32
    return %arg0, %arg2, %c0_i32 : i32, i32, i32
  }
  func.func @transform_2(%arg0: i32, %arg1: i32, %arg2: i32) -> (i32, i32, i32) {
    %c0_i32 = arith.constant 0 : i32
    %c0_i32_0 = arith.constant 0 : i32
    return %arg0, %arg1, %c0_i32 : i32, i32, i32
  }
  func.func @transform_3(%arg0: i32, %arg1: i32, %arg2: i32) -> (i32, i32) {
    %c0_i32 = arith.constant 0 : i32
    %c0_i32_0 = arith.constant 0 : i32
    %c0_i32_1 = arith.constant 0 : i32
    return %c0_i32, %c0_i32_0 : i32, i32
  }
  func.func @transform_4(%arg0: i32, %arg1: i32, %arg2: i32) -> (i32, i32) {
    %c0_i32 = arith.constant 0 : i32
    %c0_i32_0 = arith.constant 0 : i32
    %c0_i32_1 = arith.constant 0 : i32
    return %c0_i32, %c0_i32_0 : i32, i32
  }
  func.func @transform_5(%arg0: i32, %arg1: i32, %arg2: i32) -> (i32, i32, i32) {
    %c0_i32 = arith.constant 0 : i32
    %c0_i32_0 = arith.constant 0 : i32
    return %arg0, %arg1, %c0_i32 : i32, i32, i32
  }
}

</mosaic_0001>

<llo_original>
// kernel: geme_pooling.3
$region0: #{geme_pooling.3}
  #allocation0 [shape = 'u32[]', space=smem, size = 0x4, offset = 0x4, fixed_abs, tag = 'smem constant byte address 0x4 - core index']
  #allocation1 [shape = 'u32[72,128]{1,0:T(1,128)}', space=vmem, size = 0x9000, scoped, tag = 'internal scratch']
  %s0 = inlined_call_operand.vmem [shape: f32[2,128,16], index: 0, kind: input, shape index: {}]
  %s1 = inlined_call_operand.hbm [shape: f32[1,16], index: 1, kind: input, shape index: {}]
  %s2 = inlined_call_operand.vmem [shape: bf16[16,32], index: 2, kind: input, shape index: {}]
  %s3 = inlined_call_operand.vmem [shape: bf16[2,128,16], index: 3, kind: output, shape index: {0}]
  %s4 = inlined_call_operand.vmem [shape: bf16[2,128,16], index: 4, kind: output, shape index: {1}]
  %5 = xla_tuple %s3, %s4
  %s6 = sld [smem:[#allocation0]]
  $region57: #{geme_pooling.3} parent=0
    _
  %s8 = ssub.s32 1, %s6
  %s9 = scalar_select 0, %s8, %s6
  $region1: #{geme_pooling.3} parent=0
    #allocation2 [shape = 'u8[512]{0}', space=vmem, size = 0x400, scoped, tag = 'input window, operand 1, single buffered']
    #allocation3 [shape = 's32[2]{0}', space=sflag, size = 0x8, scoped, tag = 'scoped memory for geme_pooling.3']
    %10 = vsyncpa [#allocation3], 0
    loop: start=0, step=1, limit=4
    $region2: #{geme_pooling.3} parent=1 // loop_pre_header
      _
    $region3: #{geme_pooling.3} parent=1 // loop_header
      %s12 = sphi 0, %s16
      %p13 = scmp.ge.s32.totalorder %s12, 4
      %s19 = sphi 0, %s31
      %s20 = sphi 0, %s27
      %s21 = sphi 0, %s19
      %s22 = sphi 0, %s20
      %s23 = sphi 0, %s21
      %s24 = sphi 0, %s22
      %s36 = sphi 0, %s38
      %s39 = sphi 0, %s36
      %s40 = sphi 0, %s39
      %s56 = sphi 0, %s40
      %s60 = sphi 0, %s60
      %s62 = sphi 0, %s60
      %s63 = sphi 0, %s62
      %s77 = sphi 0, %s63
      %s81 = sphi 0, %s81
      %s83 = sphi 0, %s81
      %s84 = sphi 0, %s83
      %s98 = sphi 0, %s84
      %s106 = sphi 0, %s108
      %s109 = sphi 0, %s106
      %s110 = sphi 0, %s109
      %s126 = sphi 0, %s110
      %s134 = sphi 0, %s136
      %s137 = sphi 0, %s134
      %s138 = sphi 0, %s137
      %s154 = sphi 0, %s138
    $region4: #{geme_pooling.3} parent=1 // loop_header_branch
      %15 = sbr.rel (%p13) target = $region8
    $region5: #{geme_pooling.3} parent=1 // loop_body
      %s17 = ssub.s32 %s12, 1
      %s18 = ssub.s32 %s12, 2
      %s25 = sadd.s32 1, %s20
      %p26 = scmp.ge.s32.totalorder %s25, 1
      %s27 = scalar_select %p26, 0, %s25
      %s28 = sadd.s32 1, %s19
      %s29 = scalar_select %p26, %s28, %s19
      %p30 = scmp.ge.s32.totalorder %s29, 2
      %s31 = scalar_select %p30, 0, %s29
      %s32 = ssub.s32 %s19, %s31
      %s33 = ssub.s32 %s20, %s27
      %s34 = sor.u32 %s32, %s33
      %p35 = scmp.eq.s32.totalorder %s34, 0
      %s37 = sadd.s32 %s36, 1
      %s38 = scalar_select %p35, %s36, %s37
      %p41 = pneg %p35
      %p42 = scmp.eq.s32.totalorder %s12, 1
      %p43 = por %p41, %p42
      %p44 = scmp.ne.s32.totalorder %s36, %s39
      %p45 = scmp.eq.s32.totalorder %s12, 0
      %p46 = por %p44, %p45
      %p47 = scmp.ne.s32.totalorder %s36, %s39
      %p48 = scmp.eq.s32.totalorder %s17, 1
      %p49 = por %p47, %p48
      %p50 = scmp.ne.s32.totalorder %s39, %s40
      %p51 = scmp.eq.s32.totalorder %s17, 0
      %p52 = por %p50, %p51
      %p53 = scmp.ne.s32.totalorder %s39, %s40
      %p54 = scmp.eq.s32.totalorder %s18, 1
      %p55 = por %p53, %p54
      %p57 = scmp.ne.s32.totalorder %s40, %s56
      %p58 = scmp.eq.s32.totalorder %s18, 0
      %p59 = por %p57, %p58
      %s61 = sadd.s32 %s60, 1
      %p64 = scmp.eq.s32.totalorder %s12, 1
      %p65 = scmp.ne.s32.totalorder %s60, %s62
      %p66 = scmp.eq.s32.totalorder %s12, 0
      %p67 = por %p65, %p66
      %p68 = scmp.ne.s32.totalorder %s60, %s62
      %p69 = scmp.eq.s32.totalorder %s17, 1
      %p70 = por %p68, %p69
      %p71 = scmp.ne.s32.totalorder %s62, %s63
      %p72 = scmp.eq.s32.totalorder %s17, 0
      %p73 = por %p71, %p72
      %p74 = scmp.ne.s32.totalorder %s62, %s63
      %p75 = scmp.eq.s32.totalorder %s18, 1
      %p76 = por %p74, %p75
      %p78 = scmp.ne.s32.totalorder %s63, %s77
      %p79 = scmp.eq.s32.totalorder %s18, 0
      %p80 = por %p78, %p79
      %s82 = sadd.s32 %s81, 1
      %p85 = scmp.eq.s32.totalorder %s12, 1
      %p86 = scmp.ne.s32.totalorder %s81, %s83
      %p87 = scmp.eq.s32.totalorder %s12, 0
      %p88 = por %p86, %p87
      %p89 = scmp.ne.s32.totalorder %s81, %s83
      %p90 = scmp.eq.s32.totalorder %s17, 1
      %p91 = por %p89, %p90
      %p92 = scmp.ne.s32.totalorder %s83, %s84
      %p93 = scmp.eq.s32.totalorder %s17, 0
      %p94 = por %p92, %p93
      %p95 = scmp.ne.s32.totalorder %s83, %s84
      %p96 = scmp.eq.s32.totalorder %s18, 1
      %p97 = por %p95, %p96
      %p99 = scmp.ne.s32.totalorder %s84, %s98
      %p100 = scmp.eq.s32.totalorder %s18, 0
      %p101 = por %p99, %p100
      %s102 = ssub.s32 %s19, %s31
      %s103 = ssub.s32 %s20, %s27
      %s104 = sor.u32 %s102, %s103
      %p105 = scmp.eq.s32.totalorder %s104, 0
      %s107 = sadd.s32 %s106, 1
      %s108 = scalar_select %p105, %s106, %s107
      %p111 = pneg %p105
      %p112 = scmp.eq.s32.totalorder %s12, 1
      %p113 = por %p111, %p112
      %p114 = scmp.ne.s32.totalorder %s106, %s109
      %p115 = scmp.eq.s32.totalorder %s12, 0
      %p116 = por %p114, %p115
      %p117 = scmp.ne.s32.totalorder %s106, %s109
      %p118 = scmp.eq.s32.totalorder %s17, 1
      %p119 = por %p117, %p118
      %p120 = scmp.ne.s32.totalorder %s109, %s110
      %p121 = scmp.eq.s32.totalorder %s17, 0
      %p122 = por %p120, %p121
      %p123 = scmp.ne.s32.totalorder %s109, %s110
      %p124 = scmp.eq.s32.totalorder %s18, 1
      %p125 = por %p123, %p124
      %p127 = scmp.ne.s32.totalorder %s110, %s126
      %p128 = scmp.eq.s32.totalorder %s18, 0
      %p129 = por %p127, %p128
      %s130 = ssub.s32 %s19, %s31
      %s131 = ssub.s32 %s20, %s27
      %s132 = sor.u32 %s130, %s131
      %p133 = scmp.eq.s32.totalorder %s132, 0
      %s135 = sadd.s32 %s134, 1
      %s136 = scalar_select %p133, %s134, %s135
      %p139 = pneg %p133
      %p140 = scmp.eq.s32.totalorder %s12, 1
      %p141 = por %p139, %p140
      %p142 = scmp.ne.s32.totalorder %s134, %s137
      %p143 = scmp.eq.s32.totalorder %s12, 0
      %p144 = por %p142, %p143
      %p145 = scmp.ne.s32.totalorder %s134, %s137
      %p146 = scmp.eq.s32.totalorder %s17, 1
      %p147 = por %p145, %p146
      %p148 = scmp.ne.s32.totalorder %s137, %s138
      %p149 = scmp.eq.s32.totalorder %s17, 0
      %p150 = por %p148, %p149
      %p151 = scmp.ne.s32.totalorder %s137, %s138
      %p152 = scmp.eq.s32.totalorder %s18, 1
      %p153 = por %p151, %p152
      %p155 = scmp.ne.s32.totalorder %s138, %s154
      %p156 = scmp.eq.s32.totalorder %s18, 0
      %p157 = por %p155, %p156
      %p158 = scmp.le.s32.totalorder 1, %s12
      %p159 = scmp.lt.s32.totalorder %s12, 3
      %p160 = pnand %p158, %p159
      %p161 = pneg %p160
      // Predicated region
      $region9: #{geme_pooling.3} parent=5 // pred_check
        _
      $region10: #{geme_pooling.3} parent=5 // pred_check_branch
        %163 = sbr.rel (%p160) target = $region12
      $region11: #{geme_pooling.3} parent=5 // pred_region
        %s164 = ssub.s32 %s12, 1
        // Predicated region
        $region13: #{geme_pooling.3} parent=11 // pred_check
          %p165 = pneg %p73
        $region14: #{geme_pooling.3} parent=11 // pred_check_branch
          %167 = sbr.rel (%p165) target = $region16
        $region15: #{geme_pooling.3} parent=11 // pred_region
          %169 = vsyncadd [#allocation3], 0
          %s171 = sshll.u32 %s1, 4
          %s172 = int_to_ptr.hbm [resolvable:$true] %s171
          %s173 = sshll.u32 [#allocation2], 4
          %s174 = int_to_ptr.vmem [resolvable:$true] %s173
          %176 = dma.hbm_to_vmem [thread:$0]  %s172, 16, %s174, [#allocation3]
        $region16: #{geme_pooling.3} parent=11 // pred_fallthru
          _
        // Predicated region
        $region17: #{geme_pooling.3} parent=11 // pred_check
          %p177 = pneg %p94
        $region18: #{geme_pooling.3} parent=11 // pred_check_branch
          %179 = sbr.rel (%p177) target = $region20
        $region19: #{geme_pooling.3} parent=11 // pred_region
          _
        $region20: #{geme_pooling.3} parent=11 // pred_fallthru
          _
      $region12: #{geme_pooling.3} parent=5 // pred_fallthru
        _
      %p180 = scmp.lt.s32.totalorder %s12, 2
      // Predicated region
      $region21: #{geme_pooling.3} parent=5 // pred_check
        %p181 = pneg %p180
      $region22: #{geme_pooling.3} parent=5 // pred_check_branch
        %183 = sbr.rel (%p181) target = $region24
      $region23: #{geme_pooling.3} parent=5 // pred_region
        // Predicated region
        $region25: #{geme_pooling.3} parent=23 // pred_check
          %p184 = pneg %p46
        $region26: #{geme_pooling.3} parent=23 // pred_check_branch
          %186 = sbr.rel (%p184) target = $region28
        $region27: #{geme_pooling.3} parent=23 // pred_region
          %s187 = smul.u32 16, %s20
          %p188 = scmp.lt.s32.totalorder %s19, 1
          %s189 = scalar_select %p188, %s19, 1
          %p190 = scmp.lt.s32.totalorder %s187, 15
          %s191 = scalar_select %p190, %s187, 15
          %s192 = smul.addr %s189, 16
          %s193 = sadd.s32 %s191, %s192
          %s194 = smul.addr %s193, 8
          %s195 = scalar_lea.vmem %s0, %s194
          %s196 = smul.u32 16, %s20
        $region28: #{geme_pooling.3} parent=23 // pred_fallthru
          _
      $region24: #{geme_pooling.3} parent=5 // pred_fallthru
        _
      %p197 = scmp.le.s32.totalorder 1, %s12
      %p198 = scmp.lt.s32.totalorder %s12, 3
      %p199 = pnand %p197, %p198
      %p200 = pneg %p199
      // Predicated region
      $region29: #{geme_pooling.3} parent=5 // pred_check
        _
      $region30: #{geme_pooling.3} parent=5 // pred_check_branch
        %202 = sbr.rel (%p199) target = $region32
      $region31: #{geme_pooling.3} parent=5 // pred_region
        %s203 = ssub.s32 %s12, 1
        // Predicated region
        $region33: #{geme_pooling.3} parent=31 // pred_check
          %p204 = pneg %p73
        $region34: #{geme_pooling.3} parent=31 // pred_check_branch
          %206 = sbr.rel (%p204) target = $region36
        $region35: #{geme_pooling.3} parent=31 // pred_region
          %208 = dma.done [#allocation3], 16
        $region36: #{geme_pooling.3} parent=31 // pred_fallthru
          _
        %s209 = smul.u32 16, %s22
        %p210 = scmp.lt.s32.totalorder %s21, 1
        %s211 = scalar_select %p210, %s21, 1
        %p212 = scmp.lt.s32.totalorder %s209, 15
        %s213 = scalar_select %p212, %s209, 15
        %s214 = smul.addr %s211, 16
        %s215 = sadd.s32 %s213, %s214
        %s216 = smul.addr %s215, 8
        %s217 = scalar_lea.vmem %s0, %s216
        %p218 = pneg %p52
        %p219 = pneg %p49
        %p220 = pneg %p73
        %p221 = pneg %p70
        %p222 = pneg %p94
        %p223 = pneg %p91
        %p224 = pneg %p122
        %p225 = pneg %p119
        %s226 = smul.u32 16, %s22
        %p227 = scmp.lt.s32.totalorder %s21, 1
        %s228 = scalar_select %p227, %s21, 1
        %p229 = scmp.lt.s32.totalorder %s226, 15
        %s230 = scalar_select %p229, %s226, 15
        %s231 = smul.addr %s228, 16
        %s232 = sadd.s32 %s230, %s231
        %s233 = smul.addr %s232, 4
        %s234 = scalar_lea.vmem %s3, %s233
        %p235 = pneg %p150
        %p236 = pneg %p147
        %s237 = smul.u32 16, %s22
        %p238 = scmp.lt.s32.totalorder %s21, 1
        %s239 = scalar_select %p238, %s21, 1
        %p240 = scmp.lt.s32.totalorder %s237, 15
        %s241 = scalar_select %p240, %s237, 15
        %s242 = smul.addr %s239, 16
        %s243 = sadd.s32 %s241, %s242
        %s244 = smul.addr %s243, 4
        %s245 = scalar_lea.vmem %s4, %s244
        %s246 = smul.u32 16, %s22
        %p247 = scmp.lt.s32.totalorder %s21, 1
        %s248 = scalar_select %p247, %s21, 1
        %p249 = scmp.lt.s32.totalorder %s246, 15
        %s250 = scalar_select %p249, %s246, 15
        %s251 = smul.addr %s248, 16
        %s252 = sadd.s32 %s250, %s251
        %s253 = smul.addr %s252, 8
        %s254 = scalar_lea.vmem %s0, %s253
        %s255 = smul.u32 16, %s22
        %s256 = smul.u32 16, %s22
        %p257 = scmp.lt.s32.totalorder %s21, 1
        %s258 = scalar_select %p257, %s21, 1
        %p259 = scmp.lt.s32.totalorder %s256, 15
        %s260 = scalar_select %p259, %s256, 15
        %s261 = smul.addr %s258, 16
        %s262 = sadd.s32 %s260, %s261
        %s263 = smul.addr %s262, 4
        %s264 = scalar_lea.vmem %s3, %s263
        %s265 = smul.u32 16, %s22
        %s266 = smul.u32 16, %s22
        %p267 = scmp.lt.s32.totalorder %s21, 1
        %s268 = scalar_select %p267, %s21, 1
        %p269 = scmp.lt.s32.totalorder %s266, 15
        %s270 = scalar_select %p269, %s266, 15
        %s271 = smul.addr %s268, 16
        %s272 = sadd.s32 %s270, %s271
        %s273 = smul.addr %s272, 4
        %s274 = scalar_lea.vmem %s4, %s273
        %s275 = smul.u32 16, %s22
        %v277 = vld [vmem:[%s254] sm:$0xff]
        %v278 = vld [vmem:[%s254 + $0x8] sm:$0xff]
        %v279 = vld [vmem:[%s254 + $0x10] sm:$0xff]
        %v280 = vld [vmem:[%s254 + $0x18] sm:$0xff]
        %v281 = vld [vmem:[%s254 + $0x20] sm:$0xff]
        %v282 = vld [vmem:[%s254 + $0x28] sm:$0xff]
        %v283 = vld [vmem:[%s254 + $0x30] sm:$0xff]
        %v284 = vld [vmem:[%s254 + $0x38] sm:$0xff]
        %v285 = vld [vmem:[%s254 + $0x40] sm:$0xff]
        %v286 = vld [vmem:[%s254 + $0x48] sm:$0xff]
        %v287 = vld [vmem:[%s254 + $0x50] sm:$0xff]
        %v288 = vld [vmem:[%s254 + $0x58] sm:$0xff]
        %v289 = vld [vmem:[%s254 + $0x60] sm:$0xff]
        %v290 = vld [vmem:[%s254 + $0x68] sm:$0xff]
        %v291 = vld [vmem:[%s254 + $0x70] sm:$0xff]
        %v292 = vld [vmem:[%s254 + $0x78] sm:$0xff]
        %vm293 = vcmask 130048
        %v294 = vsel %vm293, %v277, 0.0
        %295 = vadd.xlane.f32.xlu0 %v294
        %v296 = vpop.xlane.xlu0 %295
        %v297 = vsel %vm293, %v278, 0.0
        %298 = vadd.xlane.f32.xlu0 %v297
        %v299 = vpop.xlane.xlu0 %298
        %v300 = vsel %vm293, %v279, 0.0
        %301 = vadd.xlane.f32.xlu0 %v300
        %v302 = vpop.xlane.xlu0 %301
        %v303 = vsel %vm293, %v280, 0.0
        %304 = vadd.xlane.f32.xlu0 %v303
        %v305 = vpop.xlane.xlu0 %304
        %v306 = vsel %vm293, %v281, 0.0
        %307 = vadd.xlane.f32.xlu0 %v306
        %v308 = vpop.xlane.xlu0 %307
        %v309 = vsel %vm293, %v282, 0.0
        %310 = vadd.xlane.f32.xlu0 %v309
        %v311 = vpop.xlane.xlu0 %310
        %v312 = vsel %vm293, %v283, 0.0
        %313 = vadd.xlane.f32.xlu0 %v312
        %v314 = vpop.xlane.xlu0 %313
        %v315 = vsel %vm293, %v284, 0.0
        %316 = vadd.xlane.f32.xlu0 %v315
        %v317 = vpop.xlane.xlu0 %316
        %v318 = vsel %vm293, %v285, 0.0
        %319 = vadd.xlane.f32.xlu0 %v318
        %v320 = vpop.xlane.xlu0 %319
        %v321 = vsel %vm293, %v286, 0.0
        %322 = vadd.xlane.f32.xlu0 %v321
        %v323 = vpop.xlane.xlu0 %322
        %v324 = vsel %vm293, %v287, 0.0
        %325 = vadd.xlane.f32.xlu0 %v324
        %v326 = vpop.xlane.xlu0 %325
        %v327 = vsel %vm293, %v288, 0.0
        %328 = vadd.xlane.f32.xlu0 %v327
        %v329 = vpop.xlane.xlu0 %328
        %v330 = vsel %vm293, %v289, 0.0
        %331 = vadd.xlane.f32.xlu0 %v330
        %v332 = vpop.xlane.xlu0 %331
        %v333 = vsel %vm293, %v290, 0.0
        %334 = vadd.xlane.f32.xlu0 %v333
        %v335 = vpop.xlane.xlu0 %334
        %v336 = vsel %vm293, %v291, 0.0
        %337 = vadd.xlane.f32.xlu0 %v336
        %v338 = vpop.xlane.xlu0 %337
        %v339 = vsel %vm293, %v292, 0.0
        %340 = vadd.xlane.f32.xlu0 %v339
        %v341 = vpop.xlane.xlu0 %340
        %v342 = vrcp.pop 16.0
        %v343 = vmul.f32 16.0, %v342
        %v344 = vsub.f32 1.0, %v343
        %v345 = vmul.f32 %v342, %v344
        %v346 = vadd.f32 %v342, %v345
        %vm347 = vweird.f32 %v342
        %v348 = vsel %vm347, %v342, %v346
        %v349 = vmul.f32 %v296, %v348
        %v350 = vmul.f32 %v299, %v348
        %v351 = vmul.f32 %v302, %v348
        %v352 = vmul.f32 %v305, %v348
        %v353 = vmul.f32 %v308, %v348
        %v354 = vmul.f32 %v311, %v348
        %v355 = vmul.f32 %v314, %v348
        %v356 = vmul.f32 %v317, %v348
        %v357 = vmul.f32 %v320, %v348
        %v358 = vmul.f32 %v323, %v348
        %v359 = vmul.f32 %v326, %v348
        %v360 = vmul.f32 %v329, %v348
        %v361 = vmul.f32 %v332, %v348
        %v362 = vmul.f32 %v335, %v348
        %v363 = vmul.f32 %v338, %v348
        %v364 = vmul.f32 %v341, %v348
        %v365 = vsub.f32 %v277, %v349
        %v366 = vsub.f32 %v278, %v350
        %v367 = vsub.f32 %v279, %v351
        %v368 = vsub.f32 %v280, %v352
        %v369 = vsub.f32 %v281, %v353
        %v370 = vsub.f32 %v282, %v354
        %v371 = vsub.f32 %v283, %v355
        %v372 = vsub.f32 %v284, %v356
        %v373 = vsub.f32 %v285, %v357
        %v374 = vsub.f32 %v286, %v358
        %v375 = vsub.f32 %v287, %v359
        %v376 = vsub.f32 %v288, %v360
        %v377 = vsub.f32 %v289, %v361
        %v378 = vsub.f32 %v290, %v362
        %v379 = vsub.f32 %v291, %v363
        %v380 = vsub.f32 %v292, %v364
        %v381 = vmul.f32 %v365, %v365
        %v382 = vmul.f32 %v366, %v366
        %v383 = vmul.f32 %v367, %v367
        %v384 = vmul.f32 %v368, %v368
        %v385 = vmul.f32 %v369, %v369
        %v386 = vmul.f32 %v370, %v370
        %v387 = vmul.f32 %v371, %v371
        %v388 = vmul.f32 %v372, %v372
        %v389 = vmul.f32 %v373, %v373
        %v390 = vmul.f32 %v374, %v374
        %v391 = vmul.f32 %v375, %v375
        %v392 = vmul.f32 %v376, %v376
        %v393 = vmul.f32 %v377, %v377
        %v394 = vmul.f32 %v378, %v378
        %v395 = vmul.f32 %v379, %v379
        %v396 = vmul.f32 %v380, %v380
        %v397 = vsel %vm293, %v381, 0.0
        %398 = vadd.xlane.f32.xlu0 %v397
        %v399 = vpop.xlane.xlu0 %398
        %v400 = vsel %vm293, %v382, 0.0
        %401 = vadd.xlane.f32.xlu0 %v400
        %v402 = vpop.xlane.xlu0 %401
        %v403 = vsel %vm293, %v383, 0.0
        %404 = vadd.xlane.f32.xlu0 %v403
        %v405 = vpop.xlane.xlu0 %404
        %v406 = vsel %vm293, %v384, 0.0
        %407 = vadd.xlane.f32.xlu0 %v406
        %v408 = vpop.xlane.xlu0 %407
        %v409 = vsel %vm293, %v385, 0.0
        %410 = vadd.xlane.f32.xlu0 %v409
        %v411 = vpop.xlane.xlu0 %410
        %v412 = vsel %vm293, %v386, 0.0
        %413 = vadd.xlane.f32.xlu0 %v412
        %v414 = vpop.xlane.xlu0 %413
        %v415 = vsel %vm293, %v387, 0.0
        %416 = vadd.xlane.f32.xlu0 %v415
        %v417 = vpop.xlane.xlu0 %416
        %v418 = vsel %vm293, %v388, 0.0
        %419 = vadd.xlane.f32.xlu0 %v418
        %v420 = vpop.xlane.xlu0 %419
        %v421 = vsel %vm293, %v389, 0.0
        %422 = vadd.xlane.f32.xlu0 %v421
        %v423 = vpop.xlane.xlu0 %422
        %v424 = vsel %vm293, %v390, 0.0
        %425 = vadd.xlane.f32.xlu0 %v424
        %v426 = vpop.xlane.xlu0 %425
        %v427 = vsel %vm293, %v391, 0.0
        %428 = vadd.xlane.f32.xlu0 %v427
        %v429 = vpop.xlane.xlu0 %428
        %v430 = vsel %vm293, %v392, 0.0
        %431 = vadd.xlane.f32.xlu0 %v430
        %v432 = vpop.xlane.xlu0 %431
        %v433 = vsel %vm293, %v393, 0.0
        %434 = vadd.xlane.f32.xlu0 %v433
        %v435 = vpop.xlane.xlu0 %434
        %v436 = vsel %vm293, %v394, 0.0
        %437 = vadd.xlane.f32.xlu0 %v436
        %v438 = vpop.xlane.xlu0 %437
        %v439 = vsel %vm293, %v395, 0.0
        %440 = vadd.xlane.f32.xlu0 %v439
        %v441 = vpop.xlane.xlu0 %440
        %v442 = vsel %vm293, %v396, 0.0
        %443 = vadd.xlane.f32.xlu0 %v442
        %v444 = vpop.xlane.xlu0 %443
        %v445 = vmul.f32 %v399, %v348
        %v446 = vmul.f32 %v402, %v348
        %v447 = vmul.f32 %v405, %v348
        %v448 = vmul.f32 %v408, %v348
        %v449 = vmul.f32 %v411, %v348
        %v450 = vmul.f32 %v414, %v348
        %v451 = vmul.f32 %v417, %v348
        %v452 = vmul.f32 %v420, %v348
        %v453 = vmul.f32 %v423, %v348
        %v454 = vmul.f32 %v426, %v348
        %v455 = vmul.f32 %v429, %v348
        %v456 = vmul.f32 %v432, %v348
        %v457 = vmul.f32 %v435, %v348
        %v458 = vmul.f32 %v438, %v348
        %v459 = vmul.f32 %v441, %v348
        %v460 = vmul.f32 %v444, %v348
        %v461 = vadd.f32 %v445, 1e-06
        %v462 = vadd.f32 %v446, 1e-06
        %v463 = vadd.f32 %v447, 1e-06
        %v464 = vadd.f32 %v448, 1e-06
        %v465 = vadd.f32 %v449, 1e-06
        %v466 = vadd.f32 %v450, 1e-06
        %v467 = vadd.f32 %v451, 1e-06
        %v468 = vadd.f32 %v452, 1e-06
        %v469 = vadd.f32 %v453, 1e-06
        %v470 = vadd.f32 %v454, 1e-06
        %v471 = vadd.f32 %v455, 1e-06
        %v472 = vadd.f32 %v456, 1e-06
        %v473 = vadd.f32 %v457, 1e-06
        %v474 = vadd.f32 %v458, 1e-06
        %v475 = vadd.f32 %v459, 1e-06
        %v476 = vadd.f32 %v460, 1e-06
        %v477 = vrsqrt.pop %v461
        %v478 = vmul.f32 %v477, %v461
        %v479 = vmul.f32 %v478, %v477
        %v480 = vmul.f32 0.5, %v479
        %v481 = vsub.f32 1.5, %v480
        %v482 = vmul.f32 %v477, %v481
        %vm483 = vweird.f32 %v461
        %vm484 = vweird.f32 %v477
        %vm485 = vmor %vm483, %vm484
        %v486 = vsel %vm485, %v477, %v482
        %v487 = vrsqrt.pop %v462
        %v488 = vmul.f32 %v487, %v462
        %v489 = vmul.f32 %v488, %v487
        %v490 = vmul.f32 0.5, %v489
        %v491 = vsub.f32 1.5, %v490
        %v492 = vmul.f32 %v487, %v491
        %vm493 = vweird.f32 %v462
        %vm494 = vweird.f32 %v487
        %vm495 = vmor %vm493, %vm494
        %v496 = vsel %vm495, %v487, %v492
        %v497 = vrsqrt.pop %v463
        %v498 = vmul.f32 %v497, %v463
        %v499 = vmul.f32 %v498, %v497
        %v500 = vmul.f32 0.5, %v499
        %v501 = vsub.f32 1.5, %v500
        %v502 = vmul.f32 %v497, %v501
        %vm503 = vweird.f32 %v463
        %vm504 = vweird.f32 %v497
        %vm505 = vmor %vm503, %vm504
        %v506 = vsel %vm505, %v497, %v502
        %v507 = vrsqrt.pop %v464
        %v508 = vmul.f32 %v507, %v464
        %v509 = vmul.f32 %v508, %v507
        %v510 = vmul.f32 0.5, %v509
        %v511 = vsub.f32 1.5, %v510
        %v512 = vmul.f32 %v507, %v511
        %vm513 = vweird.f32 %v464
        %vm514 = vweird.f32 %v507
        %vm515 = vmor %vm513, %vm514
        %v516 = vsel %vm515, %v507, %v512
        %v517 = vrsqrt.pop %v465
        %v518 = vmul.f32 %v517, %v465
        %v519 = vmul.f32 %v518, %v517
        %v520 = vmul.f32 0.5, %v519
        %v521 = vsub.f32 1.5, %v520
        %v522 = vmul.f32 %v517, %v521
        %vm523 = vweird.f32 %v465
        %vm524 = vweird.f32 %v517
        %vm525 = vmor %vm523, %vm524
        %v526 = vsel %vm525, %v517, %v522
        %v527 = vrsqrt.pop %v466
        %v528 = vmul.f32 %v527, %v466
        %v529 = vmul.f32 %v528, %v527
        %v530 = vmul.f32 0.5, %v529
        %v531 = vsub.f32 1.5, %v530
        %v532 = vmul.f32 %v527, %v531
        %vm533 = vweird.f32 %v466
        %vm534 = vweird.f32 %v527
        %vm535 = vmor %vm533, %vm534
        %v536 = vsel %vm535, %v527, %v532
        %v537 = vrsqrt.pop %v467
        %v538 = vmul.f32 %v537, %v467
        %v539 = vmul.f32 %v538, %v537
        %v540 = vmul.f32 0.5, %v539
        %v541 = vsub.f32 1.5, %v540
        %v542 = vmul.f32 %v537, %v541
        %vm543 = vweird.f32 %v467
        %vm544 = vweird.f32 %v537
        %vm545 = vmor %vm543, %vm544
        %v546 = vsel %vm545, %v537, %v542
        %v547 = vrsqrt.pop %v468
        %v548 = vmul.f32 %v547, %v468
        %v549 = vmul.f32 %v548, %v547
        %v550 = vmul.f32 0.5, %v549
        %v551 = vsub.f32 1.5, %v550
        %v552 = vmul.f32 %v547, %v551
        %vm553 = vweird.f32 %v468
        %vm554 = vweird.f32 %v547
        %vm555 = vmor %vm553, %vm554
        %v556 = vsel %vm555, %v547, %v552
        %v557 = vrsqrt.pop %v469
        %v558 = vmul.f32 %v557, %v469
        %v559 = vmul.f32 %v558, %v557
        %v560 = vmul.f32 0.5, %v559
        %v561 = vsub.f32 1.5, %v560
        %v562 = vmul.f32 %v557, %v561
        %vm563 = vweird.f32 %v469
        %vm564 = vweird.f32 %v557
        %vm565 = vmor %vm563, %vm564
        %v566 = vsel %vm565, %v557, %v562
        %v567 = vrsqrt.pop %v470
        %v568 = vmul.f32 %v567, %v470
        %v569 = vmul.f32 %v568, %v567
        %v570 = vmul.f32 0.5, %v569
        %v571 = vsub.f32 1.5, %v570
        %v572 = vmul.f32 %v567, %v571
        %vm573 = vweird.f32 %v470
        %vm574 = vweird.f32 %v567
        %vm575 = vmor %vm573, %vm574
        %v576 = vsel %vm575, %v567, %v572
        %v577 = vrsqrt.pop %v471
        %v578 = vmul.f32 %v577, %v471
        %v579 = vmul.f32 %v578, %v577
        %v580 = vmul.f32 0.5, %v579
        %v581 = vsub.f32 1.5, %v580
        %v582 = vmul.f32 %v577, %v581
        %vm583 = vweird.f32 %v471
        %vm584 = vweird.f32 %v577
        %vm585 = vmor %vm583, %vm584
        %v586 = vsel %vm585, %v577, %v582
        %v587 = vrsqrt.pop %v472
        %v588 = vmul.f32 %v587, %v472
        %v589 = vmul.f32 %v588, %v587
        %v590 = vmul.f32 0.5, %v589
        %v591 = vsub.f32 1.5, %v590
        %v592 = vmul.f32 %v587, %v591
        %vm593 = vweird.f32 %v472
        %vm594 = vweird.f32 %v587
        %vm595 = vmor %vm593, %vm594
        %v596 = vsel %vm595, %v587, %v592
        %v597 = vrsqrt.pop %v473
        %v598 = vmul.f32 %v597, %v473
        %v599 = vmul.f32 %v598, %v597
        %v600 = vmul.f32 0.5, %v599
        %v601 = vsub.f32 1.5, %v600
        %v602 = vmul.f32 %v597, %v601
        %vm603 = vweird.f32 %v473
        %vm604 = vweird.f32 %v597
        %vm605 = vmor %vm603, %vm604
        %v606 = vsel %vm605, %v597, %v602
        %v607 = vrsqrt.pop %v474
        %v608 = vmul.f32 %v607, %v474
        %v609 = vmul.f32 %v608, %v607
        %v610 = vmul.f32 0.5, %v609
        %v611 = vsub.f32 1.5, %v610
        %v612 = vmul.f32 %v607, %v611
        %vm613 = vweird.f32 %v474
        %vm614 = vweird.f32 %v607
        %vm615 = vmor %vm613, %vm614
        %v616 = vsel %vm615, %v607, %v612
        %v617 = vrsqrt.pop %v475
        %v618 = vmul.f32 %v617, %v475
        %v619 = vmul.f32 %v618, %v617
        %v620 = vmul.f32 0.5, %v619
        %v621 = vsub.f32 1.5, %v620
        %v622 = vmul.f32 %v617, %v621
        %vm623 = vweird.f32 %v475
        %vm624 = vweird.f32 %v617
        %vm625 = vmor %vm623, %vm624
        %v626 = vsel %vm625, %v617, %v622
        %v627 = vrsqrt.pop %v476
        %v628 = vmul.f32 %v627, %v476
        %v629 = vmul.f32 %v628, %v627
        %v630 = vmul.f32 0.5, %v629
        %v631 = vsub.f32 1.5, %v630
        %v632 = vmul.f32 %v627, %v631
        %vm633 = vweird.f32 %v476
        %vm634 = vweird.f32 %v627
        %vm635 = vmor %vm633, %vm634
        %v636 = vsel %vm635, %v627, %v632
        %v637 = vmul.f32 %v365, %v486
        %v638 = vmul.f32 %v366, %v496
        %v639 = vmul.f32 %v367, %v506
        %v640 = vmul.f32 %v368, %v516
        %v641 = vmul.f32 %v369, %v526
        %v642 = vmul.f32 %v370, %v536
        %v643 = vmul.f32 %v371, %v546
        %v644 = vmul.f32 %v372, %v556
        %v645 = vmul.f32 %v373, %v566
        %v646 = vmul.f32 %v374, %v576
        %v647 = vmul.f32 %v375, %v586
        %v648 = vmul.f32 %v376, %v596
        %v649 = vmul.f32 %v377, %v606
        %v650 = vmul.f32 %v378, %v616
        %v651 = vmul.f32 %v379, %v626
        %v652 = vmul.f32 %v380, %v636
        %v653 = vld [vmem:[#allocation2] sm:$0x1]
        %v655 = vperm.slane %v653, 0
        %v657 = vmul.f32 %v637, %v655
        %v658 = vmul.f32 %v638, %v655
        %v659 = vmul.f32 %v639, %v655
        %v660 = vmul.f32 %v640, %v655
        %v661 = vmul.f32 %v641, %v655
        %v662 = vmul.f32 %v642, %v655
        %v663 = vmul.f32 %v643, %v655
        %v664 = vmul.f32 %v644, %v655
        %v665 = vmul.f32 %v645, %v655
        %v666 = vmul.f32 %v646, %v655
        %v667 = vmul.f32 %v647, %v655
        %v668 = vmul.f32 %v648, %v655
        %v669 = vmul.f32 %v649, %v655
        %v670 = vmul.f32 %v650, %v655
        %v671 = vmul.f32 %v651, %v655
        %v672 = vmul.f32 %v652, %v655
        %v673 = vpack.c.bf16 %v658, %v657
        %v674 = vpack.c.bf16 %v660, %v659
        %v675 = vpack.c.bf16 %v662, %v661
        %v676 = vpack.c.bf16 %v664, %v663
        %v677 = vpack.c.bf16 %v666, %v665
        %v678 = vpack.c.bf16 %v668, %v667
        %v679 = vpack.c.bf16 %v670, %v669
        %v680 = vpack.c.bf16 %v672, %v671
        %v681 = vld [vmem:[%s2] sm:$0xf]
        %v682 = vld [vmem:[%s2 + $0x4] sm:$0xf]
        %v685 = vunpack.c.l.b16 %v681
        %v686 = vunpack.c.l.b16 %v682
        %v687 = vpack.c.b16 %v686, %v685
        %v690 = vsel %vm293, %v673, 0
        %v693 = vsel %vm293, %v674, 0
        %v696 = vsel %vm293, %v675, 0
        %v699 = vsel %vm293, %v676, 0
        %v702 = vsel %vm293, %v677, 0
        %v705 = vsel %vm293, %v678, 0
        %v708 = vsel %vm293, %v679, 0
        %v711 = vsel %vm293, %v680, 0
        %713 = vmatpush.bf16.msra.mxu0 0
        %714 = vmatpush.bf16.msra.mxu0 0
        %715 = vmatpush.bf16.msra.mxu0 0
        %716 = vmatpush.bf16.msra.mxu0 0
        %717 = vmatpush.bf16.msra.mxu0 0
        %718 = vmatpush.bf16.msra.mxu0 0
        %719 = vmatpush.bf16.msra.mxu0 0
        %720 = vmatpush.bf16.msra.mxu0 %v687
        %721 = vmatmul.bf16.gmra.mxu0 %v690
        %v722 = vpop.f32.mrf.mxu0
        %v723 = vadd.f32 0.0, %v722
        %v724 = vpop.f32.mrf.mxu0
        %v725 = vadd.f32 0.0, %v724
        %726 = vmatmul.bf16.gmra.mxu0 %v693
        %v727 = vpop.f32.mrf.mxu0
        %v728 = vadd.f32 0.0, %v727
        %v729 = vpop.f32.mrf.mxu0
        %v730 = vadd.f32 0.0, %v729
        %731 = vmatmul.bf16.gmra.mxu0 %v696
        %v732 = vpop.f32.mrf.mxu0
        %v733 = vadd.f32 0.0, %v732
        %v734 = vpop.f32.mrf.mxu0
        %v735 = vadd.f32 0.0, %v734
        %736 = vmatmul.bf16.gmra.mxu0 %v699
        %v737 = vpop.f32.mrf.mxu0
        %v738 = vadd.f32 0.0, %v737
        %v739 = vpop.f32.mrf.mxu0
        %v740 = vadd.f32 0.0, %v739
        %741 = vmatmul.bf16.gmra.mxu0 %v702
        %v742 = vpop.f32.mrf.mxu0
        %v743 = vadd.f32 0.0, %v742
        %v744 = vpop.f32.mrf.mxu0
        %v745 = vadd.f32 0.0, %v744
        %746 = vmatmul.bf16.gmra.mxu0 %v705
        %v747 = vpop.f32.mrf.mxu0
        %v748 = vadd.f32 0.0, %v747
        %v749 = vpop.f32.mrf.mxu0
        %v750 = vadd.f32 0.0, %v749
        %751 = vmatmul.bf16.gmra.mxu0 %v708
        %v752 = vpop.f32.mrf.mxu0
        %v753 = vadd.f32 0.0, %v752
        %v754 = vpop.f32.mrf.mxu0
        %v755 = vadd.f32 0.0, %v754
        %756 = vmatmul.bf16.gmra.mxu0 %v711
        %v757 = vpop.f32.mrf.mxu0
        %v758 = vadd.f32 0.0, %v757
        %v759 = vpop.f32.mrf.mxu0
        %v760 = vadd.f32 0.0, %v759
        %761 = vdwg.mxu0
        %v762 = vmul.f32 %v723, %v723
        %v763 = vmul.f32 %v725, %v725
        %v764 = vmul.f32 %v728, %v728
        %v765 = vmul.f32 %v730, %v730
        %v766 = vmul.f32 %v733, %v733
        %v767 = vmul.f32 %v735, %v735
        %v768 = vmul.f32 %v738, %v738
        %v769 = vmul.f32 %v740, %v740
        %v770 = vmul.f32 %v743, %v743
        %v771 = vmul.f32 %v745, %v745
        %v772 = vmul.f32 %v748, %v748
        %v773 = vmul.f32 %v750, %v750
        %v774 = vmul.f32 %v753, %v753
        %v775 = vmul.f32 %v755, %v755
        %v776 = vmul.f32 %v758, %v758
        %v777 = vmul.f32 %v760, %v760
        %v778 = vsel %vm293, %v762, 0.0
        %779 = vadd.xlane.f32.xlu0 %v778
        %v780 = vpop.xlane.xlu0 %779
        %v781 = vsel %vm293, %v763, 0.0
        %782 = vadd.xlane.f32.xlu0 %v781
        %v783 = vpop.xlane.xlu0 %782
        %v784 = vsel %vm293, %v764, 0.0
        %785 = vadd.xlane.f32.xlu0 %v784
        %v786 = vpop.xlane.xlu0 %785
        %v787 = vsel %vm293, %v765, 0.0
        %788 = vadd.xlane.f32.xlu0 %v787
        %v789 = vpop.xlane.xlu0 %788
        %v790 = vsel %vm293, %v766, 0.0
        %791 = vadd.xlane.f32.xlu0 %v790
        %v792 = vpop.xlane.xlu0 %791
        %v793 = vsel %vm293, %v767, 0.0
        %794 = vadd.xlane.f32.xlu0 %v793
        %v795 = vpop.xlane.xlu0 %794
        %v796 = vsel %vm293, %v768, 0.0
        %797 = vadd.xlane.f32.xlu0 %v796
        %v798 = vpop.xlane.xlu0 %797
        %v799 = vsel %vm293, %v769, 0.0
        %800 = vadd.xlane.f32.xlu0 %v799
        %v801 = vpop.xlane.xlu0 %800
        %v802 = vsel %vm293, %v770, 0.0
        %803 = vadd.xlane.f32.xlu0 %v802
        %v804 = vpop.xlane.xlu0 %803
        %v805 = vsel %vm293, %v771, 0.0
        %806 = vadd.xlane.f32.xlu0 %v805
        %v807 = vpop.xlane.xlu0 %806
        %v808 = vsel %vm293, %v772, 0.0
        %809 = vadd.xlane.f32.xlu0 %v808
        %v810 = vpop.xlane.xlu0 %809
        %v811 = vsel %vm293, %v773, 0.0
        %812 = vadd.xlane.f32.xlu0 %v811
        %v813 = vpop.xlane.xlu0 %812
        %v814 = vsel %vm293, %v774, 0.0
        %815 = vadd.xlane.f32.xlu0 %v814
        %v816 = vpop.xlane.xlu0 %815
        %v817 = vsel %vm293, %v775, 0.0
        %818 = vadd.xlane.f32.xlu0 %v817
        %v819 = vpop.xlane.xlu0 %818
        %v820 = vsel %vm293, %v776, 0.0
        %821 = vadd.xlane.f32.xlu0 %v820
        %v822 = vpop.xlane.xlu0 %821
        %v823 = vsel %vm293, %v777, 0.0
        %824 = vadd.xlane.f32.xlu0 %v823
        %v825 = vpop.xlane.xlu0 %824
        %v826 = vadd.f32 %v780, 1e-12
        %v827 = vadd.f32 %v783, 1e-12
        %v828 = vadd.f32 %v786, 1e-12
        %v829 = vadd.f32 %v789, 1e-12
        %v830 = vadd.f32 %v792, 1e-12
        %v831 = vadd.f32 %v795, 1e-12
        %v832 = vadd.f32 %v798, 1e-12
        %v833 = vadd.f32 %v801, 1e-12
        %v834 = vadd.f32 %v804, 1e-12
        %v835 = vadd.f32 %v807, 1e-12
        %v836 = vadd.f32 %v810, 1e-12
        %v837 = vadd.f32 %v813, 1e-12
        %v838 = vadd.f32 %v816, 1e-12
        %v839 = vadd.f32 %v819, 1e-12
        %v840 = vadd.f32 %v822, 1e-12
        %v841 = vadd.f32 %v825, 1e-12
        %v842 = vrsqrt.pop %v826
        %v843 = vmul.f32 %v842, %v826
        %v844 = vmul.f32 %v843, %v842
        %v845 = vmul.f32 0.5, %v844
        %v846 = vsub.f32 1.5, %v845
        %v847 = vmul.f32 %v842, %v846
        %vm848 = vweird.f32 %v826
        %vm849 = vweird.f32 %v842
        %vm850 = vmor %vm848, %vm849
        %v851 = vsel %vm850, %v842, %v847
        %v852 = vrsqrt.pop %v827
        %v853 = vmul.f32 %v852, %v827
        %v854 = vmul.f32 %v853, %v852
        %v855 = vmul.f32 0.5, %v854
        %v856 = vsub.f32 1.5, %v855
        %v857 = vmul.f32 %v852, %v856
        %vm858 = vweird.f32 %v827
        %vm859 = vweird.f32 %v852
        %vm860 = vmor %vm858, %vm859
        %v861 = vsel %vm860, %v852, %v857
        %v862 = vrsqrt.pop %v828
        %v863 = vmul.f32 %v862, %v828
        %v864 = vmul.f32 %v863, %v862
        %v865 = vmul.f32 0.5, %v864
        %v866 = vsub.f32 1.5, %v865
        %v867 = vmul.f32 %v862, %v866
        %vm868 = vweird.f32 %v828
        %vm869 = vweird.f32 %v862
        %vm870 = vmor %vm868, %vm869
        %v871 = vsel %vm870, %v862, %v867
        %v872 = vrsqrt.pop %v829
        %v873 = vmul.f32 %v872, %v829
        %v874 = vmul.f32 %v873, %v872
        %v875 = vmul.f32 0.5, %v874
        %v876 = vsub.f32 1.5, %v875
        %v877 = vmul.f32 %v872, %v876
        %vm878 = vweird.f32 %v829
        %vm879 = vweird.f32 %v872
        %vm880 = vmor %vm878, %vm879
        %v881 = vsel %vm880, %v872, %v877
        %v882 = vrsqrt.pop %v830
        %v883 = vmul.f32 %v882, %v830
        %v884 = vmul.f32 %v883, %v882
        %v885 = vmul.f32 0.5, %v884
        %v886 = vsub.f32 1.5, %v885
        %v887 = vmul.f32 %v882, %v886
        %vm888 = vweird.f32 %v830
        %vm889 = vweird.f32 %v882
        %vm890 = vmor %vm888, %vm889
        %v891 = vsel %vm890, %v882, %v887
        %v892 = vrsqrt.pop %v831
        %v893 = vmul.f32 %v892, %v831
        %v894 = vmul.f32 %v893, %v892
        %v895 = vmul.f32 0.5, %v894
        %v896 = vsub.f32 1.5, %v895
        %v897 = vmul.f32 %v892, %v896
        %vm898 = vweird.f32 %v831
        %vm899 = vweird.f32 %v892
        %vm900 = vmor %vm898, %vm899
        %v901 = vsel %vm900, %v892, %v897
        %v902 = vrsqrt.pop %v832
        %v903 = vmul.f32 %v902, %v832
        %v904 = vmul.f32 %v903, %v902
        %v905 = vmul.f32 0.5, %v904
        %v906 = vsub.f32 1.5, %v905
        %v907 = vmul.f32 %v902, %v906
        %vm908 = vweird.f32 %v832
        %vm909 = vweird.f32 %v902
        %vm910 = vmor %vm908, %vm909
        %v911 = vsel %vm910, %v902, %v907
        %v912 = vrsqrt.pop %v833
        %v913 = vmul.f32 %v912, %v833
        %v914 = vmul.f32 %v913, %v912
        %v915 = vmul.f32 0.5, %v914
        %v916 = vsub.f32 1.5, %v915
        %v917 = vmul.f32 %v912, %v916
        %vm918 = vweird.f32 %v833
        %vm919 = vweird.f32 %v912
        %vm920 = vmor %vm918, %vm919
        %v921 = vsel %vm920, %v912, %v917
        %v922 = vrsqrt.pop %v834
        %v923 = vmul.f32 %v922, %v834
        %v924 = vmul.f32 %v923, %v922
        %v925 = vmul.f32 0.5, %v924
        %v926 = vsub.f32 1.5, %v925
        %v927 = vmul.f32 %v922, %v926
        %vm928 = vweird.f32 %v834
        %vm929 = vweird.f32 %v922
        %vm930 = vmor %vm928, %vm929
        %v931 = vsel %vm930, %v922, %v927
        %v932 = vrsqrt.pop %v835
        %v933 = vmul.f32 %v932, %v835
        %v934 = vmul.f32 %v933, %v932
        %v935 = vmul.f32 0.5, %v934
        %v936 = vsub.f32 1.5, %v935
        %v937 = vmul.f32 %v932, %v936
        %vm938 = vweird.f32 %v835
        %vm939 = vweird.f32 %v932
        %vm940 = vmor %vm938, %vm939
        %v941 = vsel %vm940, %v932, %v937
        %v942 = vrsqrt.pop %v836
        %v943 = vmul.f32 %v942, %v836
        %v944 = vmul.f32 %v943, %v942
        %v945 = vmul.f32 0.5, %v944
        %v946 = vsub.f32 1.5, %v945
        %v947 = vmul.f32 %v942, %v946
        %vm948 = vweird.f32 %v836
        %vm949 = vweird.f32 %v942
        %vm950 = vmor %vm948, %vm949
        %v951 = vsel %vm950, %v942, %v947
        %v952 = vrsqrt.pop %v837
        %v953 = vmul.f32 %v952, %v837
        %v954 = vmul.f32 %v953, %v952
        %v955 = vmul.f32 0.5, %v954
        %v956 = vsub.f32 1.5, %v955
        %v957 = vmul.f32 %v952, %v956
        %vm958 = vweird.f32 %v837
        %vm959 = vweird.f32 %v952
        %vm960 = vmor %vm958, %vm959
        %v961 = vsel %vm960, %v952, %v957
        %v962 = vrsqrt.pop %v838
        %v963 = vmul.f32 %v962, %v838
        %v964 = vmul.f32 %v963, %v962
        %v965 = vmul.f32 0.5, %v964
        %v966 = vsub.f32 1.5, %v965
        %v967 = vmul.f32 %v962, %v966
        %vm968 = vweird.f32 %v838
        %vm969 = vweird.f32 %v962
        %vm970 = vmor %vm968, %vm969
        %v971 = vsel %vm970, %v962, %v967
        %v972 = vrsqrt.pop %v839
        %v973 = vmul.f32 %v972, %v839
        %v974 = vmul.f32 %v973, %v972
        %v975 = vmul.f32 0.5, %v974
        %v976 = vsub.f32 1.5, %v975
        %v977 = vmul.f32 %v972, %v976
        %vm978 = vweird.f32 %v839
        %vm979 = vweird.f32 %v972
        %vm980 = vmor %vm978, %vm979
        %v981 = vsel %vm980, %v972, %v977
        %v982 = vrsqrt.pop %v840
        %v983 = vmul.f32 %v982, %v840
        %v984 = vmul.f32 %v983, %v982
        %v985 = vmul.f32 0.5, %v984
        %v986 = vsub.f32 1.5, %v985
        %v987 = vmul.f32 %v982, %v986
        %vm988 = vweird.f32 %v840
        %vm989 = vweird.f32 %v982
        %vm990 = vmor %vm988, %vm989
        %v991 = vsel %vm990, %v982, %v987
        %v992 = vrsqrt.pop %v841
        %v993 = vmul.f32 %v992, %v841
        %v994 = vmul.f32 %v993, %v992
        %v995 = vmul.f32 0.5, %v994
        %v996 = vsub.f32 1.5, %v995
        %v997 = vmul.f32 %v992, %v996
        %vm998 = vweird.f32 %v841
        %vm999 = vweird.f32 %v992
        %vm1000 = vmor %vm998, %vm999
        %v1001 = vsel %vm1000, %v992, %v997
        %v1002 = vmul.f32 %v723, %v851
        %v1003 = vmul.f32 %v725, %v861
        %v1004 = vmul.f32 %v728, %v871
        %v1005 = vmul.f32 %v730, %v881
        %v1006 = vmul.f32 %v733, %v891
        %v1007 = vmul.f32 %v735, %v901
        %v1008 = vmul.f32 %v738, %v911
        %v1009 = vmul.f32 %v740, %v921
        %v1010 = vmul.f32 %v743, %v931
        %v1011 = vmul.f32 %v745, %v941
        %v1012 = vmul.f32 %v748, %v951
        %v1013 = vmul.f32 %v750, %v961
        %v1014 = vmul.f32 %v753, %v971
        %v1015 = vmul.f32 %v755, %v981
        %v1016 = vmul.f32 %v758, %v991
        %v1017 = vmul.f32 %v760, %v1001
        %v1018 = vpack.c.bf16 %v1002, %v1002
        %v1019 = vpack.c.bf16 %v1003, %v1003
        %v1020 = vpack.c.bf16 %v1004, %v1004
        %v1021 = vpack.c.bf16 %v1005, %v1005
        %v1022 = vpack.c.bf16 %v1006, %v1006
        %v1023 = vpack.c.bf16 %v1007, %v1007
        %v1024 = vpack.c.bf16 %v1008, %v1008
        %v1025 = vpack.c.bf16 %v1009, %v1009
        %v1026 = vpack.c.bf16 %v1010, %v1010
        %v1027 = vpack.c.bf16 %v1011, %v1011
        %v1028 = vpack.c.bf16 %v1012, %v1012
        %v1029 = vpack.c.bf16 %v1013, %v1013
        %v1030 = vpack.c.bf16 %v1014, %v1014
        %v1031 = vpack.c.bf16 %v1015, %v1015
        %v1032 = vpack.c.bf16 %v1016, %v1016
        %v1033 = vpack.c.bf16 %v1017, %v1017
        %vm1034 = vcmask 125952
        %1035 = vst.msk [vmem:[%s264] sm:$0xf] %vm1034, %v1018
        %1036 = vst.msk [vmem:[%s264 + $0x4] sm:$0xf] %vm1034, %v1019
        %1037 = vst.msk [vmem:[%s264 + $0x8] sm:$0xf] %vm1034, %v1020
        %1038 = vst.msk [vmem:[%s264 + $0xc] sm:$0xf] %vm1034, %v1021
        %1039 = vst.msk [vmem:[%s264 + $0x10] sm:$0xf] %vm1034, %v1022
        %1040 = vst.msk [vmem:[%s264 + $0x14] sm:$0xf] %vm1034, %v1023
        %1041 = vst.msk [vmem:[%s264 + $0x18] sm:$0xf] %vm1034, %v1024
        %1042 = vst.msk [vmem:[%s264 + $0x1c] sm:$0xf] %vm1034, %v1025
        %1043 = vst.msk [vmem:[%s264 + $0x20] sm:$0xf] %vm1034, %v1026
        %1044 = vst.msk [vmem:[%s264 + $0x24] sm:$0xf] %vm1034, %v1027
        %1045 = vst.msk [vmem:[%s264 + $0x28] sm:$0xf] %vm1034, %v1028
        %1046 = vst.msk [vmem:[%s264 + $0x2c] sm:$0xf] %vm1034, %v1029
        %1047 = vst.msk [vmem:[%s264 + $0x30] sm:$0xf] %vm1034, %v1030
        %1048 = vst.msk [vmem:[%s264 + $0x34] sm:$0xf] %vm1034, %v1031
        %1049 = vst.msk [vmem:[%s264 + $0x38] sm:$0xf] %vm1034, %v1032
        %1050 = vst.msk [vmem:[%s264 + $0x3c] sm:$0xf] %vm1034, %v1033
        %v1051 = vpack.c.bf16 %v723, %v723
        %v1052 = vpack.c.bf16 %v725, %v725
        %v1053 = vpack.c.bf16 %v728, %v728
        %v1054 = vpack.c.bf16 %v730, %v730
        %v1055 = vpack.c.bf16 %v733, %v733
        %v1056 = vpack.c.bf16 %v735, %v735
        %v1057 = vpack.c.bf16 %v738, %v738
        %v1058 = vpack.c.bf16 %v740, %v740
        %v1059 = vpack.c.bf16 %v743, %v743
        %v1060 = vpack.c.bf16 %v745, %v745
        %v1061 = vpack.c.bf16 %v748, %v748
        %v1062 = vpack.c.bf16 %v750, %v750
        %v1063 = vpack.c.bf16 %v753, %v753
        %v1064 = vpack.c.bf16 %v755, %v755
        %v1065 = vpack.c.bf16 %v758, %v758
        %v1066 = vpack.c.bf16 %v760, %v760
        %1083 = vrot.lane.b32.xlu0 %v1051, 112
        %v1084 = vpop.permute.xlu0 %1083
        %1085 = vrot.lane.b32.xlu0 %v1052, 112
        %v1086 = vpop.permute.xlu0 %1085
        %1087 = vrot.lane.b32.xlu0 %v1053, 112
        %v1088 = vpop.permute.xlu0 %1087
        %1089 = vrot.lane.b32.xlu0 %v1054, 112
        %v1090 = vpop.permute.xlu0 %1089
        %1091 = vrot.lane.b32.xlu0 %v1055, 112
        %v1092 = vpop.permute.xlu0 %1091
        %1093 = vrot.lane.b32.xlu0 %v1056, 112
        %v1094 = vpop.permute.xlu0 %1093
        %1095 = vrot.lane.b32.xlu0 %v1057, 112
        %v1096 = vpop.permute.xlu0 %1095
        %1097 = vrot.lane.b32.xlu0 %v1058, 112
        %v1098 = vpop.permute.xlu0 %1097
        %1099 = vrot.lane.b32.xlu0 %v1059, 112
        %v1100 = vpop.permute.xlu0 %1099
        %1101 = vrot.lane.b32.xlu0 %v1060, 112
        %v1102 = vpop.permute.xlu0 %1101
        %1103 = vrot.lane.b32.xlu0 %v1061, 112
        %v1104 = vpop.permute.xlu0 %1103
        %1105 = vrot.lane.b32.xlu0 %v1062, 112
        %v1106 = vpop.permute.xlu0 %1105
        %1107 = vrot.lane.b32.xlu0 %v1063, 112
        %v1108 = vpop.permute.xlu0 %1107
        %1109 = vrot.lane.b32.xlu0 %v1064, 112
        %v1110 = vpop.permute.xlu0 %1109
        %1111 = vrot.lane.b32.xlu0 %v1065, 112
        %v1112 = vpop.permute.xlu0 %1111
        %1113 = vrot.lane.b32.xlu0 %v1066, 112
        %v1114 = vpop.permute.xlu0 %1113
        %1131 = vst.msk [vmem:[%s274] sm:$0xf] %vm1034, %v1084
        %1132 = vst.msk [vmem:[%s274 + $0x4] sm:$0xf] %vm1034, %v1086
        %1133 = vst.msk [vmem:[%s274 + $0x8] sm:$0xf] %vm1034, %v1088
        %1134 = vst.msk [vmem:[%s274 + $0xc] sm:$0xf] %vm1034, %v1090
        %1135 = vst.msk [vmem:[%s274 + $0x10] sm:$0xf] %vm1034, %v1092
        %1136 = vst.msk [vmem:[%s274 + $0x14] sm:$0xf] %vm1034, %v1094
        %1137 = vst.msk [vmem:[%s274 + $0x18] sm:$0xf] %vm1034, %v1096
        %1138 = vst.msk [vmem:[%s274 + $0x1c] sm:$0xf] %vm1034, %v1098
        %1139 = vst.msk [vmem:[%s274 + $0x20] sm:$0xf] %vm1034, %v1100
        %1140 = vst.msk [vmem:[%s274 + $0x24] sm:$0xf] %vm1034, %v1102
        %1141 = vst.msk [vmem:[%s274 + $0x28] sm:$0xf] %vm1034, %v1104
        %1142 = vst.msk [vmem:[%s274 + $0x2c] sm:$0xf] %vm1034, %v1106
        %1143 = vst.msk [vmem:[%s274 + $0x30] sm:$0xf] %vm1034, %v1108
        %1144 = vst.msk [vmem:[%s274 + $0x34] sm:$0xf] %vm1034, %v1110
        %1145 = vst.msk [vmem:[%s274 + $0x38] sm:$0xf] %vm1034, %v1112
        %1146 = vst.msk [vmem:[%s274 + $0x3c] sm:$0xf] %vm1034, %v1114
        %s1147 = smul.u32 16, %s22
        %p1148 = scmp.lt.s32.totalorder %s21, 1
        %s1149 = scalar_select %p1148, %s21, 1
        %p1150 = scmp.lt.s32.totalorder %s1147, 15
        %s1151 = scalar_select %p1150, %s1147, 15
        %s1152 = smul.addr %s1149, 16
        %s1153 = sadd.s32 %s1151, %s1152
        %s1154 = smul.addr %s1153, 4
        %s1155 = scalar_lea.vmem %s3, %s1154
        %s1156 = smul.u32 16, %s22
        %p1157 = scmp.lt.s32.totalorder %s21, 1
        %s1158 = scalar_select %p1157, %s21, 1
        %p1159 = scmp.lt.s32.totalorder %s1156, 15
        %s1160 = scalar_select %p1159, %s1156, 15
        %s1161 = smul.addr %s1158, 16
        %s1162 = sadd.s32 %s1160, %s1161
        %s1163 = smul.addr %s1162, 4
        %s1164 = scalar_lea.vmem %s4, %s1163
        // Predicated region
        $region37: #{geme_pooling.3} parent=31 // pred_check
          %p1165 = pneg %p119
        $region38: #{geme_pooling.3} parent=31 // pred_check_branch
          %1167 = sbr.rel (%p1165) target = $region40
        $region39: #{geme_pooling.3} parent=31 // pred_region
          %s1168 = smul.u32 16, %s22
        $region40: #{geme_pooling.3} parent=31 // pred_fallthru
          _
        // Predicated region
        $region41: #{geme_pooling.3} parent=31 // pred_check
          %p1169 = pneg %p147
        $region42: #{geme_pooling.3} parent=31 // pred_check_branch
          %1171 = sbr.rel (%p1169) target = $region44
        $region43: #{geme_pooling.3} parent=31 // pred_region
          %s1172 = smul.u32 16, %s22
        $region44: #{geme_pooling.3} parent=31 // pred_fallthru
          _
      $region32: #{geme_pooling.3} parent=5 // pred_fallthru
        _
      %p1173 = scmp.le.s32.totalorder 2, %s12
      // Predicated region
      $region45: #{geme_pooling.3} parent=5 // pred_check
        %p1174 = pneg %p1173
      $region46: #{geme_pooling.3} parent=5 // pred_check_branch
        %1176 = sbr.rel (%p1174) target = $region48
      $region47: #{geme_pooling.3} parent=5 // pred_region
        %s1177 = ssub.s32 %s12, 2
        // Predicated region
        $region49: #{geme_pooling.3} parent=47 // pred_check
          %p1178 = pneg %p125
        $region50: #{geme_pooling.3} parent=47 // pred_check_branch
          %1180 = sbr.rel (%p1178) target = $region52
        $region51: #{geme_pooling.3} parent=47 // pred_region
          %s1181 = smul.u32 16, %s24
          %p1182 = scmp.lt.s32.totalorder %s23, 1
          %s1183 = scalar_select %p1182, %s23, 1
          %p1184 = scmp.lt.s32.totalorder %s1181, 15
          %s1185 = scalar_select %p1184, %s1181, 15
          %s1186 = smul.addr %s1183, 16
          %s1187 = sadd.s32 %s1185, %s1186
          %s1188 = smul.addr %s1187, 4
          %s1189 = scalar_lea.vmem %s3, %s1188
        $region52: #{geme_pooling.3} parent=47 // pred_fallthru
          _
        // Predicated region
        $region53: #{geme_pooling.3} parent=47 // pred_check
          %p1190 = pneg %p153
        $region54: #{geme_pooling.3} parent=47 // pred_check_branch
          %1192 = sbr.rel (%p1190) target = $region56
        $region55: #{geme_pooling.3} parent=47 // pred_region
          %s1193 = smul.u32 16, %s24
          %p1194 = scmp.lt.s32.totalorder %s23, 1
          %s1195 = scalar_select %p1194, %s23, 1
          %p1196 = scmp.lt.s32.totalorder %s1193, 15
          %s1197 = scalar_select %p1196, %s1193, 15
          %s1198 = smul.addr %s1195, 16
          %s1199 = sadd.s32 %s1197, %s1198
          %s1200 = smul.addr %s1199, 4
          %s1201 = scalar_lea.vmem %s4, %s1200
        $region56: #{geme_pooling.3} parent=47 // pred_fallthru
          _
      $region48: #{geme_pooling.3} parent=5 // pred_fallthru
        _
    $region6: #{geme_pooling.3} parent=1 // loop_footer
      %s16 = sadd.s32 1, %s12
    $region7: #{geme_pooling.3} parent=1 // loop_footer_branch
      %11 = sbr.rel target = $region3
    $region8: #{geme_pooling.3} parent=1 // loop_exit
      _
    %1202 = vsyncpa [#allocation3], 1
    %s1203 = scalar_lea.sflag [#allocation3], 1
    %1204 = vsyncpa %s1203, 1

// kernel: geme_pooling.4
$region0: #{geme_pooling.4}
  #allocation0 [shape = 'u32[]', space=smem, size = 0x4, offset = 0x4, fixed_abs, tag = 'smem constant byte address 0x4 - core index']
  #allocation1 [shape = 'u32[72,128]{1,0:T(1,128)}', space=vmem, size = 0x9000, scoped, tag = 'internal scratch']
  #allocation2 [shape = 's32[1]{0}', space=sflag, size = 0x4, scoped, tag = 'scoped memory for geme_pooling.4']
  #allocation3 [shape = 's32[1]{0:T(128)S(6)}', space=smem, size = 0x200, scoped, tag = 'prefetched SMEM operand 0']
  #allocation4 [shape = 's32[1]{0:T(128)S(6)}', space=smem, size = 0x200, scoped, tag = 'prefetched SMEM operand 1']
  %s0 = inlined_call_operand.<no memory space> [shape: s32[1], index: 0, kind: input, shape index: {}, may-alias: {0,1}]
  %s1 = inlined_call_operand.<no memory space> [shape: s32[1], index: 1, kind: input, shape index: {}, may-alias: {0,1}]
  %s2 = inlined_call_operand.vmem [shape: bf16[2,128,16], index: 2, kind: input, shape index: {}, may-alias: {2,3}]
  %s3 = inlined_call_operand.vmem [shape: bf16[2,128,16], index: 3, kind: input, shape index: {}, may-alias: {2,3}]
  %s4 = inlined_call_operand.vmem [shape: f32[2,128,128], index: 4, kind: output, shape index: {}]
  %s5 = sld [smem:[#allocation0]]
  $region41: #{geme_pooling.4} parent=0
    _
  %s7 = ssub.s32 1, %s5
  %s8 = scalar_select 0, %s7, %s5
  %9 = sst [smem:[#allocation3]] %s0
  %10 = sst [smem:[#allocation4]] %s1
  loop: start=0, step=1, limit=4
  $region2: #{geme_pooling.4} parent=0 // loop_pre_header
    _
  $region3: #{geme_pooling.4} parent=0 // loop_header
    %s12 = sphi 0, %s16
    %p13 = scmp.ge.s32.totalorder %s12, 4
    %s19 = sphi 0, %s31
    %s20 = sphi 0, %s27
    %s21 = sphi 0, %s19
    %s22 = sphi 0, %s20
    %s23 = sphi 0, %s21
    %s24 = sphi 0, %s22
    %s38 = sphi 0, %s40
    %s41 = sphi 0, %s38
    %s42 = sphi 0, %s41
    %s58 = sphi 0, %s42
    %s68 = sphi 0, %s70
    %s71 = sphi 0, %s68
    %s72 = sphi 0, %s71
    %s88 = sphi 0, %s72
    %s102 = sphi 0, %s104
    %s105 = sphi 0, %s102
    %s106 = sphi 0, %s105
    %s122 = sphi 0, %s106
  $region4: #{geme_pooling.4} parent=0 // loop_header_branch
    %15 = sbr.rel (%p13) target = $region8
  $region5: #{geme_pooling.4} parent=0 // loop_body
    %s17 = ssub.s32 %s12, 1
    %s18 = ssub.s32 %s12, 2
    %s25 = sadd.s32 1, %s20
    %p26 = scmp.ge.s32.totalorder %s25, 1
    %s27 = scalar_select %p26, 0, %s25
    %s28 = sadd.s32 1, %s19
    %s29 = scalar_select %p26, %s28, %s19
    %p30 = scmp.ge.s32.totalorder %s29, 2
    %s31 = scalar_select %p30, 0, %s29
    %s32 = sld [smem:[#allocation3 + %s20]]
    %s33 = sld [smem:[#allocation3 + %s27]]
    %s34 = ssub.s32 %s19, %s31
    %s35 = ssub.s32 %s32, %s33
    %s36 = sor.u32 %s34, %s35
    %p37 = scmp.eq.s32.totalorder %s36, 0
    %s39 = sadd.s32 %s38, 1
    %s40 = scalar_select %p37, %s38, %s39
    %p43 = pneg %p37
    %p44 = scmp.eq.s32.totalorder %s12, 1
    %p45 = por %p43, %p44
    %p46 = scmp.ne.s32.totalorder %s38, %s41
    %p47 = scmp.eq.s32.totalorder %s12, 0
    %p48 = por %p46, %p47
    %p49 = scmp.ne.s32.totalorder %s38, %s41
    %p50 = scmp.eq.s32.totalorder %s17, 1
    %p51 = por %p49, %p50
    %p52 = scmp.ne.s32.totalorder %s41, %s42
    %p53 = scmp.eq.s32.totalorder %s17, 0
    %p54 = por %p52, %p53
    %p55 = scmp.ne.s32.totalorder %s41, %s42
    %p56 = scmp.eq.s32.totalorder %s18, 1
    %p57 = por %p55, %p56
    %p59 = scmp.ne.s32.totalorder %s42, %s58
    %p60 = scmp.eq.s32.totalorder %s18, 0
    %p61 = por %p59, %p60
    %s62 = sld [smem:[#allocation4 + %s20]]
    %s63 = sld [smem:[#allocation4 + %s27]]
    %s64 = ssub.s32 %s19, %s31
    %s65 = ssub.s32 %s62, %s63
    %s66 = sor.u32 %s64, %s65
    %p67 = scmp.eq.s32.totalorder %s66, 0
    %s69 = sadd.s32 %s68, 1
    %s70 = scalar_select %p67, %s68, %s69
    %p73 = pneg %p67
    %p74 = scmp.eq.s32.totalorder %s12, 1
    %p75 = por %p73, %p74
    %p76 = scmp.ne.s32.totalorder %s68, %s71
    %p77 = scmp.eq.s32.totalorder %s12, 0
    %p78 = por %p76, %p77
    %p79 = scmp.ne.s32.totalorder %s68, %s71
    %p80 = scmp.eq.s32.totalorder %s17, 1
    %p81 = por %p79, %p80
    %p82 = scmp.ne.s32.totalorder %s71, %s72
    %p83 = scmp.eq.s32.totalorder %s17, 0
    %p84 = por %p82, %p83
    %p85 = scmp.ne.s32.totalorder %s71, %s72
    %p86 = scmp.eq.s32.totalorder %s18, 1
    %p87 = por %p85, %p86
    %p89 = scmp.ne.s32.totalorder %s72, %s88
    %p90 = scmp.eq.s32.totalorder %s18, 0
    %p91 = por %p89, %p90
    %s92 = sld [smem:[#allocation3 + %s20]]
    %s93 = sld [smem:[#allocation4 + %s20]]
    %s94 = sld [smem:[#allocation3 + %s27]]
    %s95 = sld [smem:[#allocation4 + %s27]]
    %s96 = ssub.s32 %s19, %s31
    %s97 = ssub.s32 %s92, %s94
    %s98 = sor.u32 %s96, %s97
    %s99 = ssub.s32 %s93, %s95
    %s100 = sor.u32 %s98, %s99
    %p101 = scmp.eq.s32.totalorder %s100, 0
    %s103 = sadd.s32 %s102, 1
    %s104 = scalar_select %p101, %s102, %s103
    %p107 = pneg %p101
    %p108 = scmp.eq.s32.totalorder %s12, 1
    %p109 = por %p107, %p108
    %p110 = scmp.ne.s32.totalorder %s102, %s105
    %p111 = scmp.eq.s32.totalorder %s12, 0
    %p112 = por %p110, %p111
    %p113 = scmp.ne.s32.totalorder %s102, %s105
    %p114 = scmp.eq.s32.totalorder %s17, 1
    %p115 = por %p113, %p114
    %p116 = scmp.ne.s32.totalorder %s105, %s106
    %p117 = scmp.eq.s32.totalorder %s17, 0
    %p118 = por %p116, %p117
    %p119 = scmp.ne.s32.totalorder %s105, %s106
    %p120 = scmp.eq.s32.totalorder %s18, 1
    %p121 = por %p119, %p120
    %p123 = scmp.ne.s32.totalorder %s106, %s122
    %p124 = scmp.eq.s32.totalorder %s18, 0
    %p125 = por %p123, %p124
    %p126 = scmp.le.s32.totalorder 1, %s12
    %p127 = scmp.lt.s32.totalorder %s12, 3
    %p128 = pnand %p126, %p127
    %p129 = pneg %p128
    // Predicated region
    $region9: #{geme_pooling.4} parent=5 // pred_check
      _
    $region10: #{geme_pooling.4} parent=5 // pred_check_branch
      %131 = sbr.rel (%p128) target = $region12
    $region11: #{geme_pooling.4} parent=5 // pred_region
      %s132 = ssub.s32 %s12, 1
    $region12: #{geme_pooling.4} parent=5 // pred_fallthru
      _
    %p133 = scmp.lt.s32.totalorder %s12, 2
    // Predicated region
    $region13: #{geme_pooling.4} parent=5 // pred_check
      %p134 = pneg %p133
    $region14: #{geme_pooling.4} parent=5 // pred_check_branch
      %136 = sbr.rel (%p134) target = $region16
    $region15: #{geme_pooling.4} parent=5 // pred_region
      // Predicated region
      $region17: #{geme_pooling.4} parent=15 // pred_check
        %p137 = pneg %p48
      $region18: #{geme_pooling.4} parent=15 // pred_check_branch
        %139 = sbr.rel (%p137) target = $region20
      $region19: #{geme_pooling.4} parent=15 // pred_region
        %s140 = sld [smem:[#allocation3 + %s20]]
        %s141 = smul.u32 16, %s140
        %p142 = scmp.lt.s32.totalorder %s19, 1
        %s143 = scalar_select %p142, %s19, 1
        %p144 = scmp.lt.s32.totalorder %s141, 15
        %s145 = scalar_select %p144, %s141, 15
        %s146 = smul.addr %s143, 16
        %s147 = sadd.s32 %s145, %s146
        %s148 = smul.addr %s147, 4
        %s149 = scalar_lea.vmem %s2, %s148
        %s150 = sld [smem:[#allocation3 + %s20]]
        %s151 = smul.u32 16, %s150
      $region20: #{geme_pooling.4} parent=15 // pred_fallthru
        _
      // Predicated region
      $region21: #{geme_pooling.4} parent=15 // pred_check
        %p152 = pneg %p78
      $region22: #{geme_pooling.4} parent=15 // pred_check_branch
        %154 = sbr.rel (%p152) target = $region24
      $region23: #{geme_pooling.4} parent=15 // pred_region
        %s155 = sld [smem:[#allocation4 + %s20]]
        %s156 = smul.u32 16, %s155
        %p157 = scmp.lt.s32.totalorder %s19, 1
        %s158 = scalar_select %p157, %s19, 1
        %p159 = scmp.lt.s32.totalorder %s156, 15
        %s160 = scalar_select %p159, %s156, 15
        %s161 = smul.addr %s158, 16
        %s162 = sadd.s32 %s160, %s161
        %s163 = smul.addr %s162, 4
        %s164 = scalar_lea.vmem %s3, %s163
        %s165 = sld [smem:[#allocation4 + %s20]]
        %s166 = smul.u32 16, %s165
      $region24: #{geme_pooling.4} parent=15 // pred_fallthru
        _
    $region16: #{geme_pooling.4} parent=5 // pred_fallthru
      _
    %p167 = scmp.le.s32.totalorder 1, %s12
    %p168 = scmp.lt.s32.totalorder %s12, 3
    %p169 = pnand %p167, %p168
    %p170 = pneg %p169
    // Predicated region
    $region25: #{geme_pooling.4} parent=5 // pred_check
      _
    $region26: #{geme_pooling.4} parent=5 // pred_check_branch
      %172 = sbr.rel (%p169) target = $region28
    $region27: #{geme_pooling.4} parent=5 // pred_region
      %s173 = ssub.s32 %s12, 1
      %s174 = sld [smem:[#allocation3 + %s22]]
      %s175 = smul.u32 16, %s174
      %p176 = scmp.lt.s32.totalorder %s21, 1
      %s177 = scalar_select %p176, %s21, 1
      %p178 = scmp.lt.s32.totalorder %s175, 15
      %s179 = scalar_select %p178, %s175, 15
      %s180 = smul.addr %s177, 16
      %s181 = sadd.s32 %s179, %s180
      %s182 = smul.addr %s181, 4
      %s183 = scalar_lea.vmem %s2, %s182
      %p184 = pneg %p54
      %p185 = pneg %p51
      %s186 = sld [smem:[#allocation4 + %s22]]
      %s187 = smul.u32 16, %s186
      %p188 = scmp.lt.s32.totalorder %s21, 1
      %s189 = scalar_select %p188, %s21, 1
      %p190 = scmp.lt.s32.totalorder %s187, 15
      %s191 = scalar_select %p190, %s187, 15
      %s192 = smul.addr %s189, 16
      %s193 = sadd.s32 %s191, %s192
      %s194 = smul.addr %s193, 4
      %s195 = scalar_lea.vmem %s3, %s194
      %p196 = pneg %p84
      %p197 = pneg %p81
      %p198 = pneg %p118
      %p199 = pneg %p115
      %s200 = sld [smem:[#allocation3 + %s22]]
      %s201 = sld [smem:[#allocation4 + %s22]]
      %s202 = smul.u32 16, %s200
      %p203 = scmp.lt.s32.totalorder %s21, 1
      %s204 = scalar_select %p203, %s21, 1
      %p205 = scmp.lt.s32.totalorder %s202, 15
      %s206 = scalar_select %p205, %s202, 15
      %p207 = scmp.lt.s32.totalorder %s201, 0
      %s208 = scalar_select %p207, %s201, 0
      %s209 = sadd.s32 %s208, %s206
      %s210 = smul.addr %s204, 16
      %s211 = sadd.s32 %s209, %s210
      %s212 = smul.addr %s211, 8
      %s213 = scalar_lea.vmem %s4, %s212
      %s214 = sld [smem:[#allocation3 + %s22]]
      %s215 = smul.u32 16, %s214
      %p216 = scmp.lt.s32.totalorder %s21, 1
      %s217 = scalar_select %p216, %s21, 1
      %p218 = scmp.lt.s32.totalorder %s215, 15
      %s219 = scalar_select %p218, %s215, 15
      %s220 = smul.addr %s217, 16
      %s221 = sadd.s32 %s219, %s220
      %s222 = smul.addr %s221, 4
      %s223 = scalar_lea.vmem %s2, %s222
      %s224 = sld [smem:[#allocation3 + %s22]]
      %s225 = smul.u32 16, %s224
      %s226 = sld [smem:[#allocation4 + %s22]]
      %s227 = smul.u32 16, %s226
      %p228 = scmp.lt.s32.totalorder %s21, 1
      %s229 = scalar_select %p228, %s21, 1
      %p230 = scmp.lt.s32.totalorder %s227, 15
      %s231 = scalar_select %p230, %s227, 15
      %s232 = smul.addr %s229, 16
      %s233 = sadd.s32 %s231, %s232
      %s234 = smul.addr %s233, 4
      %s235 = scalar_lea.vmem %s3, %s234
      %s236 = sld [smem:[#allocation4 + %s22]]
      %s237 = smul.u32 16, %s236
      %s238 = sld [smem:[#allocation3 + %s22]]
      %s239 = sld [smem:[#allocation4 + %s22]]
      %s240 = smul.u32 16, %s238
      %p241 = scmp.lt.s32.totalorder %s21, 1
      %s242 = scalar_select %p241, %s21, 1
      %p243 = scmp.lt.s32.totalorder %s240, 15
      %s244 = scalar_select %p243, %s240, 15
      %p245 = scmp.lt.s32.totalorder %s239, 0
      %s246 = scalar_select %p245, %s239, 0
      %s247 = sadd.s32 %s246, %s244
      %s248 = smul.addr %s242, 16
      %s249 = sadd.s32 %s247, %s248
      %s250 = smul.addr %s249, 8
      %s251 = scalar_lea.vmem %s4, %s250
      %s252 = sld [smem:[#allocation3 + %s22]]
      %s253 = sld [smem:[#allocation4 + %s22]]
      %s254 = smul.u32 16, %s252
      %v255 = vld [vmem:[%s223] sm:$0xf]
      %v256 = vld [vmem:[%s223 + $0x4] sm:$0xf]
      %v257 = vld [vmem:[%s223 + $0x8] sm:$0xf]
      %v258 = vld [vmem:[%s223 + $0xc] sm:$0xf]
      %v259 = vld [vmem:[%s223 + $0x10] sm:$0xf]
      %v260 = vld [vmem:[%s223 + $0x14] sm:$0xf]
      %v261 = vld [vmem:[%s223 + $0x18] sm:$0xf]
      %v262 = vld [vmem:[%s223 + $0x1c] sm:$0xf]
      %v263 = vld [vmem:[%s223 + $0x20] sm:$0xf]
      %v264 = vld [vmem:[%s223 + $0x24] sm:$0xf]
      %v265 = vld [vmem:[%s223 + $0x28] sm:$0xf]
      %v266 = vld [vmem:[%s223 + $0x2c] sm:$0xf]
      %v267 = vld [vmem:[%s223 + $0x30] sm:$0xf]
      %v268 = vld [vmem:[%s223 + $0x34] sm:$0xf]
      %v269 = vld [vmem:[%s223 + $0x38] sm:$0xf]
      %v270 = vld [vmem:[%s223 + $0x3c] sm:$0xf]
      %v271 = vld [vmem:[%s235] sm:$0xf]
      %v272 = vld [vmem:[%s235 + $0x4] sm:$0xf]
      %v273 = vld [vmem:[%s235 + $0x8] sm:$0xf]
      %v274 = vld [vmem:[%s235 + $0xc] sm:$0xf]
      %v275 = vld [vmem:[%s235 + $0x10] sm:$0xf]
      %v276 = vld [vmem:[%s235 + $0x14] sm:$0xf]
      %v277 = vld [vmem:[%s235 + $0x18] sm:$0xf]
      %v278 = vld [vmem:[%s235 + $0x1c] sm:$0xf]
      %v279 = vld [vmem:[%s235 + $0x20] sm:$0xf]
      %v280 = vld [vmem:[%s235 + $0x24] sm:$0xf]
      %v281 = vld [vmem:[%s235 + $0x28] sm:$0xf]
      %v282 = vld [vmem:[%s235 + $0x2c] sm:$0xf]
      %v283 = vld [vmem:[%s235 + $0x30] sm:$0xf]
      %v284 = vld [vmem:[%s235 + $0x34] sm:$0xf]
      %v285 = vld [vmem:[%s235 + $0x38] sm:$0xf]
      %v286 = vld [vmem:[%s235 + $0x3c] sm:$0xf]
      %v303 = vunpack.c.l.b16 %v255
      %v304 = vunpack.c.l.b16 %v256
      %v305 = vunpack.c.l.b16 %v257
      %v306 = vunpack.c.l.b16 %v258
      %v307 = vunpack.c.l.b16 %v259
      %v308 = vunpack.c.l.b16 %v260
      %v309 = vunpack.c.l.b16 %v261
      %v310 = vunpack.c.l.b16 %v262
      %v311 = vunpack.c.l.b16 %v263
      %v312 = vunpack.c.l.b16 %v264
      %v313 = vunpack.c.l.b16 %v265
      %v314 = vunpack.c.l.b16 %v266
      %v315 = vunpack.c.l.b16 %v267
      %v316 = vunpack.c.l.b16 %v268
      %v317 = vunpack.c.l.b16 %v269
      %v318 = vunpack.c.l.b16 %v270
      %v319 = vpack.c.b16 %v304, %v303
      %v320 = vpack.c.b16 %v306, %v305
      %v321 = vpack.c.b16 %v308, %v307
      %v322 = vpack.c.b16 %v310, %v309
      %v323 = vpack.c.b16 %v312, %v311
      %v324 = vpack.c.b16 %v314, %v313
      %v325 = vpack.c.b16 %v316, %v315
      %v326 = vpack.c.b16 %v318, %v317
      %v343 = vunpack.c.l.b16 %v271
      %v344 = vunpack.c.l.b16 %v272
      %v345 = vunpack.c.l.b16 %v273
      %v346 = vunpack.c.l.b16 %v274
      %v347 = vunpack.c.l.b16 %v275
      %v348 = vunpack.c.l.b16 %v276
      %v349 = vunpack.c.l.b16 %v277
      %v350 = vunpack.c.l.b16 %v278
      %v351 = vunpack.c.l.b16 %v279
      %v352 = vunpack.c.l.b16 %v280
      %v353 = vunpack.c.l.b16 %v281
      %v354 = vunpack.c.l.b16 %v282
      %v355 = vunpack.c.l.b16 %v283
      %v356 = vunpack.c.l.b16 %v284
      %v357 = vunpack.c.l.b16 %v285
      %v358 = vunpack.c.l.b16 %v286
      %v359 = vpack.c.b16 %v344, %v343
      %v360 = vpack.c.b16 %v346, %v345
      %v361 = vpack.c.b16 %v348, %v347
      %v362 = vpack.c.b16 %v350, %v349
      %v363 = vpack.c.b16 %v352, %v351
      %v364 = vpack.c.b16 %v354, %v353
      %v365 = vpack.c.b16 %v356, %v355
      %v366 = vpack.c.b16 %v358, %v357
      %vm367 = vcmask 130048
      %v369 = vsel %vm367, %v319, 0
      %v372 = vsel %vm367, %v320, 0
      %v375 = vsel %vm367, %v321, 0
      %v378 = vsel %vm367, %v322, 0
      %v381 = vsel %vm367, %v323, 0
      %v384 = vsel %vm367, %v324, 0
      %v387 = vsel %vm367, %v325, 0
      %v390 = vsel %vm367, %v326, 0
      %v393 = vsel %vm367, %v359, 0
      %v396 = vsel %vm367, %v360, 0
      %v399 = vsel %vm367, %v361, 0
      %v402 = vsel %vm367, %v362, 0
      %v405 = vsel %vm367, %v363, 0
      %v408 = vsel %vm367, %v364, 0
      %v411 = vsel %vm367, %v365, 0
      %v414 = vsel %vm367, %v366, 0
      %416 = vmatpush.bf16.xpose.msra.mxu0 %v414
      %417 = vmatpush.bf16.xpose.msra.mxu0 %v411
      %418 = vmatpush.bf16.xpose.msra.mxu0 %v408
      %419 = vmatpush.bf16.xpose.msra.mxu0 %v405
      %420 = vmatpush.bf16.xpose.msra.mxu0 %v402
      %421 = vmatpush.bf16.xpose.msra.mxu0 %v399
      %422 = vmatpush.bf16.xpose.msra.mxu0 %v396
      %423 = vmatpush.bf16.xpose.msra.mxu0 %v393
      %424 = vmatmul.bf16.gmra.mxu0 %v369
      %v425 = vpop.f32.mrf.mxu0
      %v426 = vadd.f32 0.0, %v425
      %v427 = vpop.f32.mrf.mxu0
      %v428 = vadd.f32 0.0, %v427
      %429 = vmatmul.bf16.gmra.mxu0 %v372
      %v430 = vpop.f32.mrf.mxu0
      %v431 = vadd.f32 0.0, %v430
      %v432 = vpop.f32.mrf.mxu0
      %v433 = vadd.f32 0.0, %v432
      %434 = vmatmul.bf16.gmra.mxu0 %v375
      %v435 = vpop.f32.mrf.mxu0
      %v436 = vadd.f32 0.0, %v435
      %v437 = vpop.f32.mrf.mxu0
      %v438 = vadd.f32 0.0, %v437
      %439 = vmatmul.bf16.gmra.mxu0 %v378
      %v440 = vpop.f32.mrf.mxu0
      %v441 = vadd.f32 0.0, %v440
      %v442 = vpop.f32.mrf.mxu0
      %v443 = vadd.f32 0.0, %v442
      %444 = vmatmul.bf16.gmra.mxu0 %v381
      %v445 = vpop.f32.mrf.mxu0
      %v446 = vadd.f32 0.0, %v445
      %v447 = vpop.f32.mrf.mxu0
      %v448 = vadd.f32 0.0, %v447
      %449 = vmatmul.bf16.gmra.mxu0 %v384
      %v450 = vpop.f32.mrf.mxu0
      %v451 = vadd.f32 0.0, %v450
      %v452 = vpop.f32.mrf.mxu0
      %v453 = vadd.f32 0.0, %v452
      %454 = vmatmul.bf16.gmra.mxu0 %v387
      %v455 = vpop.f32.mrf.mxu0
      %v456 = vadd.f32 0.0, %v455
      %v457 = vpop.f32.mrf.mxu0
      %v458 = vadd.f32 0.0, %v457
      %459 = vmatmul.bf16.gmra.mxu0 %v390
      %v460 = vpop.f32.mrf.mxu0
      %v461 = vadd.f32 0.0, %v460
      %v462 = vpop.f32.mrf.mxu0
      %v463 = vadd.f32 0.0, %v462
      %464 = vdwg.mxu0
      %465 = vst [vmem:[%s251] sm:$0xff] %v426
      %466 = vst [vmem:[%s251 + $0x8] sm:$0xff] %v428
      %467 = vst [vmem:[%s251 + $0x10] sm:$0xff] %v431
      %468 = vst [vmem:[%s251 + $0x18] sm:$0xff] %v433
      %469 = vst [vmem:[%s251 + $0x20] sm:$0xff] %v436
      %470 = vst [vmem:[%s251 + $0x28] sm:$0xff] %v438
      %471 = vst [vmem:[%s251 + $0x30] sm:$0xff] %v441
      %472 = vst [vmem:[%s251 + $0x38] sm:$0xff] %v443
      %473 = vst [vmem:[%s251 + $0x40] sm:$0xff] %v446
      %474 = vst [vmem:[%s251 + $0x48] sm:$0xff] %v448
      %475 = vst [vmem:[%s251 + $0x50] sm:$0xff] %v451
      %476 = vst [vmem:[%s251 + $0x58] sm:$0xff] %v453
      %477 = vst [vmem:[%s251 + $0x60] sm:$0xff] %v456
      %478 = vst [vmem:[%s251 + $0x68] sm:$0xff] %v458
      %479 = vst [vmem:[%s251 + $0x70] sm:$0xff] %v461
      %480 = vst [vmem:[%s251 + $0x78] sm:$0xff] %v463
      %s481 = sld [smem:[#allocation3 + %s22]]
      %s482 = sld [smem:[#allocation4 + %s22]]
      %s483 = smul.u32 16, %s481
      %p484 = scmp.lt.s32.totalorder %s21, 1
      %s485 = scalar_select %p484, %s21, 1
      %p486 = scmp.lt.s32.totalorder %s483, 15
      %s487 = scalar_select %p486, %s483, 15
      %p488 = scmp.lt.s32.totalorder %s482, 0
      %s489 = scalar_select %p488, %s482, 0
      %s490 = sadd.s32 %s489, %s487
      %s491 = smul.addr %s485, 16
      %s492 = sadd.s32 %s490, %s491
      %s493 = smul.addr %s492, 8
      %s494 = scalar_lea.vmem %s4, %s493
      // Predicated region
      $region29: #{geme_pooling.4} parent=27 // pred_check
        %p495 = pneg %p115
      $region30: #{geme_pooling.4} parent=27 // pred_check_branch
        %497 = sbr.rel (%p495) target = $region32
      $region31: #{geme_pooling.4} parent=27 // pred_region
        %s498 = sld [smem:[#allocation3 + %s22]]
        %s499 = sld [smem:[#allocation4 + %s22]]
        %s500 = smul.u32 16, %s498
      $region32: #{geme_pooling.4} parent=27 // pred_fallthru
        _
    $region28: #{geme_pooling.4} parent=5 // pred_fallthru
      _
    %p501 = scmp.le.s32.totalorder 2, %s12
    // Predicated region
    $region33: #{geme_pooling.4} parent=5 // pred_check
      %p502 = pneg %p501
    $region34: #{geme_pooling.4} parent=5 // pred_check_branch
      %504 = sbr.rel (%p502) target = $region36
    $region35: #{geme_pooling.4} parent=5 // pred_region
      %s505 = ssub.s32 %s12, 2
      // Predicated region
      $region37: #{geme_pooling.4} parent=35 // pred_check
        %p506 = pneg %p121
      $region38: #{geme_pooling.4} parent=35 // pred_check_branch
        %508 = sbr.rel (%p506) target = $region40
      $region39: #{geme_pooling.4} parent=35 // pred_region
        %s509 = sld [smem:[#allocation3 + %s24]]
        %s510 = sld [smem:[#allocation4 + %s24]]
        %s511 = smul.u32 16, %s509
        %p512 = scmp.lt.s32.totalorder %s23, 1
        %s513 = scalar_select %p512, %s23, 1
        %p514 = scmp.lt.s32.totalorder %s511, 15
        %s515 = scalar_select %p514, %s511, 15
        %p516 = scmp.lt.s32.totalorder %s510, 0
        %s517 = scalar_select %p516, %s510, 0
        %s518 = sadd.s32 %s517, %s515
        %s519 = smul.addr %s513, 16
        %s520 = sadd.s32 %s518, %s519
        %s521 = smul.addr %s520, 8
        %s522 = scalar_lea.vmem %s4, %s521
      $region40: #{geme_pooling.4} parent=35 // pred_fallthru
        _
    $region36: #{geme_pooling.4} parent=5 // pred_fallthru
      _
  $region6: #{geme_pooling.4} parent=0 // loop_footer
    %s16 = sadd.s32 1, %s12
  $region7: #{geme_pooling.4} parent=0 // loop_footer_branch
    %11 = sbr.rel target = $region3
  $region8: #{geme_pooling.4} parent=0 // loop_exit
    _

// kernel: custom-call.18
$region0: #{custom-call.18}
  %s0 = inlined_call_operand.vmem [shape: pred[2,120], index: 0, kind: output, shape index: {}]

// kernel: geme_pooling.5
$region0: #{geme_pooling.5}
  #allocation0 [shape = 'u32[]', space=smem, size = 0x4, offset = 0x4, fixed_abs, tag = 'smem constant byte address 0x4 - core index']
  #allocation1 [shape = 'u32[72,128]{1,0:T(1,128)}', space=vmem, size = 0x9000, scoped, tag = 'internal scratch']
  #allocation2 [shape = 'f32[4,16]{1,0:T(4,128)}', space=vmem, size = 0x800, scoped, tag = 'scratch operand']
  %s0 = inlined_call_operand.vmem [shape: bf16[2,4,128], index: 0, kind: input, shape index: {}]
  %s1 = inlined_call_operand.vmem [shape: bf16[2,128,16], index: 1, kind: input, shape index: {}]
  %s2 = inlined_call_operand.vmem [shape: f32[2,4,1], index: 2, kind: input, shape index: {}]
  %s3 = inlined_call_operand.vmem [shape: f32[1,16], index: 3, kind: input, shape index: {}]
  %s4 = inlined_call_operand.vmem [shape: bf16[16,32], index: 4, kind: input, shape index: {}]
  %s5 = inlined_call_operand.hbm [shape: f32[2,4,32], index: 5, kind: output, shape index: {}]
  %s6 = sld [smem:[#allocation0]]
  $region61: #{geme_pooling.5} parent=0
    _
  %s8 = ssub.s32 1, %s6
  %s9 = scalar_select 0, %s8, %s6
  $region1: #{geme_pooling.5} parent=0
    #allocation3 [shape = 'u8[4096]{0}', space=vmem, size = 0x1000, scoped, tag = 'output window, operand 0']
    #allocation4 [shape = 's32[2]{0}', space=sflag, size = 0x8, scoped, tag = 'scoped memory for geme_pooling.5']
    %10 = vsyncpa [#allocation4], 0
    %s11 = scalar_lea.sflag [#allocation4], 1
    %12 = vsyncpa %s11, 0
    loop: start=0, step=1, limit=4
    $region2: #{geme_pooling.5} parent=1 // loop_pre_header
      _
    $region3: #{geme_pooling.5} parent=1 // loop_header
      %s14 = sphi 0, %s18
      %p15 = scmp.ge.s32.totalorder %s14, 4
      %s21 = sphi 0, %s40
      %s22 = sphi 0, %s36
      %s23 = sphi 0, %s32
      %s24 = sphi 0, %s21
      %s25 = sphi 0, %s22
      %s26 = sphi 0, %s23
      %s27 = sphi 0, %s24
      %s28 = sphi 0, %s25
      %s29 = sphi 0, %s26
      %s47 = sphi 0, %s49
      %s50 = sphi 0, %s47
      %s51 = sphi 0, %s50
      %s67 = sphi 0, %s51
      %s75 = sphi 0, %s77
      %s78 = sphi 0, %s75
      %s79 = sphi 0, %s78
      %s95 = sphi 0, %s79
      %s103 = sphi 0, %s105
      %s106 = sphi 0, %s103
      %s107 = sphi 0, %s106
      %s123 = sphi 0, %s107
      %s127 = sphi 0, %s127
      %s129 = sphi 0, %s127
      %s130 = sphi 0, %s129
      %s144 = sphi 0, %s130
      %s148 = sphi 0, %s148
      %s150 = sphi 0, %s148
      %s151 = sphi 0, %s150
      %s165 = sphi 0, %s151
      %s173 = sphi 0, %s175
      %s176 = sphi 0, %s173
      %s177 = sphi 0, %s176
      %s193 = sphi 0, %s177
    $region4: #{geme_pooling.5} parent=1 // loop_header_branch
      %17 = sbr.rel (%p15) target = $region8
    $region5: #{geme_pooling.5} parent=1 // loop_body
      %s19 = ssub.s32 %s14, 1
      %s20 = ssub.s32 %s14, 2
      %s30 = sadd.s32 1, %s23
      %p31 = scmp.ge.s32.totalorder %s30, 1
      %s32 = scalar_select %p31, 0, %s30
      %s33 = sadd.s32 1, %s22
      %s34 = scalar_select %p31, %s33, %s22
      %p35 = scmp.ge.s32.totalorder %s34, 1
      %s36 = scalar_select %p35, 0, %s34
      %s37 = sadd.s32 1, %s21
      %s38 = scalar_select %p35, %s37, %s21
      %p39 = scmp.ge.s32.totalorder %s38, 2
      %s40 = scalar_select %p39, 0, %s38
      %s41 = ssub.s32 %s21, %s40
      %s42 = ssub.s32 %s22, %s36
      %s43 = sor.u32 %s41, %s42
      %s44 = ssub.s32 %s23, %s32
      %s45 = sor.u32 %s43, %s44
      %p46 = scmp.eq.s32.totalorder %s45, 0
      %s48 = sadd.s32 %s47, 1
      %s49 = scalar_select %p46, %s47, %s48
      %p52 = pneg %p46
      %p53 = scmp.eq.s32.totalorder %s14, 1
      %p54 = por %p52, %p53
      %p55 = scmp.ne.s32.totalorder %s47, %s50
      %p56 = scmp.eq.s32.totalorder %s14, 0
      %p57 = por %p55, %p56
      %p58 = scmp.ne.s32.totalorder %s47, %s50
      %p59 = scmp.eq.s32.totalorder %s19, 1
      %p60 = por %p58, %p59
      %p61 = scmp.ne.s32.totalorder %s50, %s51
      %p62 = scmp.eq.s32.totalorder %s19, 0
      %p63 = por %p61, %p62
      %p64 = scmp.ne.s32.totalorder %s50, %s51
      %p65 = scmp.eq.s32.totalorder %s20, 1
      %p66 = por %p64, %p65
      %p68 = scmp.ne.s32.totalorder %s51, %s67
      %p69 = scmp.eq.s32.totalorder %s20, 0
      %p70 = por %p68, %p69
      %s71 = ssub.s32 %s21, %s40
      %s72 = ssub.s32 %s23, %s32
      %s73 = sor.u32 %s71, %s72
      %p74 = scmp.eq.s32.totalorder %s73, 0
      %s76 = sadd.s32 %s75, 1
      %s77 = scalar_select %p74, %s75, %s76
      %p80 = pneg %p74
      %p81 = scmp.eq.s32.totalorder %s14, 1
      %p82 = por %p80, %p81
      %p83 = scmp.ne.s32.totalorder %s75, %s78
      %p84 = scmp.eq.s32.totalorder %s14, 0
      %p85 = por %p83, %p84
      %p86 = scmp.ne.s32.totalorder %s75, %s78
      %p87 = scmp.eq.s32.totalorder %s19, 1
      %p88 = por %p86, %p87
      %p89 = scmp.ne.s32.totalorder %s78, %s79
      %p90 = scmp.eq.s32.totalorder %s19, 0
      %p91 = por %p89, %p90
      %p92 = scmp.ne.s32.totalorder %s78, %s79
      %p93 = scmp.eq.s32.totalorder %s20, 1
      %p94 = por %p92, %p93
      %p96 = scmp.ne.s32.totalorder %s79, %s95
      %p97 = scmp.eq.s32.totalorder %s20, 0
      %p98 = por %p96, %p97
      %s99 = ssub.s32 %s21, %s40
      %s100 = ssub.s32 %s22, %s36
      %s101 = sor.u32 %s99, %s100
      %p102 = scmp.eq.s32.totalorder %s101, 0
      %s104 = sadd.s32 %s103, 1
      %s105 = scalar_select %p102, %s103, %s104
      %p108 = pneg %p102
      %p109 = scmp.eq.s32.totalorder %s14, 1
      %p110 = por %p108, %p109
      %p111 = scmp.ne.s32.totalorder %s103, %s106
      %p112 = scmp.eq.s32.totalorder %s14, 0
      %p113 = por %p111, %p112
      %p114 = scmp.ne.s32.totalorder %s103, %s106
      %p115 = scmp.eq.s32.totalorder %s19, 1
      %p116 = por %p114, %p115
      %p117 = scmp.ne.s32.totalorder %s106, %s107
      %p118 = scmp.eq.s32.totalorder %s19, 0
      %p119 = por %p117, %p118
      %p120 = scmp.ne.s32.totalorder %s106, %s107
      %p121 = scmp.eq.s32.totalorder %s20, 1
      %p122 = por %p120, %p121
      %p124 = scmp.ne.s32.totalorder %s107, %s123
      %p125 = scmp.eq.s32.totalorder %s20, 0
      %p126 = por %p124, %p125
      %s128 = sadd.s32 %s127, 1
      %p131 = scmp.eq.s32.totalorder %s14, 1
      %p132 = scmp.ne.s32.totalorder %s127, %s129
      %p133 = scmp.eq.s32.totalorder %s14, 0
      %p134 = por %p132, %p133
      %p135 = scmp.ne.s32.totalorder %s127, %s129
      %p136 = scmp.eq.s32.totalorder %s19, 1
      %p137 = por %p135, %p136
      %p138 = scmp.ne.s32.totalorder %s129, %s130
      %p139 = scmp.eq.s32.totalorder %s19, 0
      %p140 = por %p138, %p139
      %p141 = scmp.ne.s32.totalorder %s129, %s130
      %p142 = scmp.eq.s32.totalorder %s20, 1
      %p143 = por %p141, %p142
      %p145 = scmp.ne.s32.totalorder %s130, %s144
      %p146 = scmp.eq.s32.totalorder %s20, 0
      %p147 = por %p145, %p146
      %s149 = sadd.s32 %s148, 1
      %p152 = scmp.eq.s32.totalorder %s14, 1
      %p153 = scmp.ne.s32.totalorder %s148, %s150
      %p154 = scmp.eq.s32.totalorder %s14, 0
      %p155 = por %p153, %p154
      %p156 = scmp.ne.s32.totalorder %s148, %s150
      %p157 = scmp.eq.s32.totalorder %s19, 1
      %p158 = por %p156, %p157
      %p159 = scmp.ne.s32.totalorder %s150, %s151
      %p160 = scmp.eq.s32.totalorder %s19, 0
      %p161 = por %p159, %p160
      %p162 = scmp.ne.s32.totalorder %s150, %s151
      %p163 = scmp.eq.s32.totalorder %s20, 1
      %p164 = por %p162, %p163
      %p166 = scmp.ne.s32.totalorder %s151, %s165
      %p167 = scmp.eq.s32.totalorder %s20, 0
      %p168 = por %p166, %p167
      %s169 = ssub.s32 %s21, %s40
      %s170 = ssub.s32 %s22, %s36
      %s171 = sor.u32 %s169, %s170
      %p172 = scmp.eq.s32.totalorder %s171, 0
      %s174 = sadd.s32 %s173, 1
      %s175 = scalar_select %p172, %s173, %s174
      %p178 = pneg %p172
      %p179 = scmp.eq.s32.totalorder %s14, 1
      %p180 = por %p178, %p179
      %p181 = scmp.ne.s32.totalorder %s173, %s176
      %p182 = scmp.eq.s32.totalorder %s14, 0
      %p183 = por %p181, %p182
      %p184 = scmp.ne.s32.totalorder %s173, %s176
      %p185 = scmp.eq.s32.totalorder %s19, 1
      %p186 = por %p184, %p185
      %p187 = scmp.ne.s32.totalorder %s176, %s177
      %p188 = scmp.eq.s32.totalorder %s19, 0
      %p189 = por %p187, %p188
      %p190 = scmp.ne.s32.totalorder %s176, %s177
      %p191 = scmp.eq.s32.totalorder %s20, 1
      %p192 = por %p190, %p191
      %p194 = scmp.ne.s32.totalorder %s177, %s193
      %p195 = scmp.eq.s32.totalorder %s20, 0
      %p196 = por %p194, %p195
      %p197 = scmp.le.s32.totalorder 1, %s14
      %p198 = scmp.lt.s32.totalorder %s14, 3
      %p199 = pnand %p197, %p198
      %p200 = pneg %p199
      // Predicated region
      $region9: #{geme_pooling.5} parent=5 // pred_check
        _
      $region10: #{geme_pooling.5} parent=5 // pred_check_branch
        %202 = sbr.rel (%p199) target = $region12
      $region11: #{geme_pooling.5} parent=5 // pred_region
        %s203 = ssub.s32 %s14, 1
        // Predicated region
        $region13: #{geme_pooling.5} parent=11 // pred_check
          %p204 = pneg %p140
        $region14: #{geme_pooling.5} parent=11 // pred_check_branch
          %206 = sbr.rel (%p204) target = $region16
        $region15: #{geme_pooling.5} parent=11 // pred_region
          _
        $region16: #{geme_pooling.5} parent=11 // pred_fallthru
          _
        // Predicated region
        $region17: #{geme_pooling.5} parent=11 // pred_check
          %p207 = pneg %p161
        $region18: #{geme_pooling.5} parent=11 // pred_check_branch
          %209 = sbr.rel (%p207) target = $region20
        $region19: #{geme_pooling.5} parent=11 // pred_region
          _
        $region20: #{geme_pooling.5} parent=11 // pred_fallthru
          _
      $region12: #{geme_pooling.5} parent=5 // pred_fallthru
        _
      %p210 = scmp.lt.s32.totalorder %s14, 2
      // Predicated region
      $region21: #{geme_pooling.5} parent=5 // pred_check
        %p211 = pneg %p210
      $region22: #{geme_pooling.5} parent=5 // pred_check_branch
        %213 = sbr.rel (%p211) target = $region24
      $region23: #{geme_pooling.5} parent=5 // pred_region
        // Predicated region
        $region25: #{geme_pooling.5} parent=23 // pred_check
          %p214 = pneg %p57
        $region26: #{geme_pooling.5} parent=23 // pred_check_branch
          %216 = sbr.rel (%p214) target = $region28
        $region27: #{geme_pooling.5} parent=23 // pred_region
          %p217 = scmp.lt.s32.totalorder %s21, 1
          %s218 = scalar_select %p217, %s21, 1
          %p219 = scmp.lt.s32.totalorder %s22, 0
          %s220 = scalar_select %p219, %s22, 0
          %p221 = scmp.lt.s32.totalorder %s23, 0
          %s222 = scalar_select %p221, %s23, 0
          %s223 = sadd.s32 %s222, %s220
          %s224 = sadd.s32 %s223, %s218
          %s225 = smul.addr %s224, 2
          %s226 = scalar_lea.vmem %s0, %s225
        $region28: #{geme_pooling.5} parent=23 // pred_fallthru
          _
        // Predicated region
        $region29: #{geme_pooling.5} parent=23 // pred_check
          %p227 = pneg %p85
        $region30: #{geme_pooling.5} parent=23 // pred_check_branch
          %229 = sbr.rel (%p227) target = $region32
        $region31: #{geme_pooling.5} parent=23 // pred_region
          %s230 = smul.u32 16, %s23
          %p231 = scmp.lt.s32.totalorder %s21, 1
          %s232 = scalar_select %p231, %s21, 1
          %p233 = scmp.lt.s32.totalorder %s230, 15
          %s234 = scalar_select %p233, %s230, 15
          %s235 = smul.addr %s232, 16
          %s236 = sadd.s32 %s234, %s235
          %s237 = smul.addr %s236, 4
          %s238 = scalar_lea.vmem %s1, %s237
          %s239 = smul.u32 16, %s23
        $region32: #{geme_pooling.5} parent=23 // pred_fallthru
          _
        // Predicated region
        $region33: #{geme_pooling.5} parent=23 // pred_check
          %p240 = pneg %p113
        $region34: #{geme_pooling.5} parent=23 // pred_check_branch
          %242 = sbr.rel (%p240) target = $region36
        $region35: #{geme_pooling.5} parent=23 // pred_region
          %p243 = scmp.lt.s32.totalorder %s21, 1
          %s244 = scalar_select %p243, %s21, 1
          %p245 = scmp.lt.s32.totalorder %s22, 0
          %s246 = scalar_select %p245, %s22, 0
          %s247 = sadd.s32 %s246, %s244
          %s248 = smul.addr %s247, 4
          %s249 = scalar_lea.vmem %s2, %s248
        $region36: #{geme_pooling.5} parent=23 // pred_fallthru
          _
      $region24: #{geme_pooling.5} parent=5 // pred_fallthru
        _
      %p250 = scmp.le.s32.totalorder 1, %s14
      %p251 = scmp.lt.s32.totalorder %s14, 3
      %p252 = pnand %p250, %p251
      %p253 = pneg %p252
      // Predicated region
      $region37: #{geme_pooling.5} parent=5 // pred_check
        _
      $region38: #{geme_pooling.5} parent=5 // pred_check_branch
        %255 = sbr.rel (%p252) target = $region40
      $region39: #{geme_pooling.5} parent=5 // pred_region
        %s256 = ssub.s32 %s14, 1
        %p257 = scmp.lt.s32.totalorder %s24, 1
        %s258 = scalar_select %p257, %s24, 1
        %p259 = scmp.lt.s32.totalorder %s25, 0
        %s260 = scalar_select %p259, %s25, 0
        %p261 = scmp.lt.s32.totalorder %s26, 0
        %s262 = scalar_select %p261, %s26, 0
        %s263 = sadd.s32 %s262, %s260
        %s264 = sadd.s32 %s263, %s258
        %s265 = smul.addr %s264, 2
        %s266 = scalar_lea.vmem %s0, %s265
        %p267 = pneg %p63
        %p268 = pneg %p60
        %s269 = smul.u32 16, %s26
        %p270 = scmp.lt.s32.totalorder %s24, 1
        %s271 = scalar_select %p270, %s24, 1
        %p272 = scmp.lt.s32.totalorder %s269, 15
        %s273 = scalar_select %p272, %s269, 15
        %s274 = smul.addr %s271, 16
        %s275 = sadd.s32 %s273, %s274
        %s276 = smul.addr %s275, 4
        %s277 = scalar_lea.vmem %s1, %s276
        %p278 = pneg %p91
        %p279 = pneg %p88
        %p280 = scmp.lt.s32.totalorder %s24, 1
        %s281 = scalar_select %p280, %s24, 1
        %p282 = scmp.lt.s32.totalorder %s25, 0
        %s283 = scalar_select %p282, %s25, 0
        %s284 = sadd.s32 %s283, %s281
        %s285 = smul.addr %s284, 4
        %s286 = scalar_lea.vmem %s2, %s285
        %p287 = pneg %p119
        %p288 = pneg %p116
        %p289 = pneg %p140
        %p290 = pneg %p137
        %p291 = pneg %p161
        %p292 = pneg %p158
        %p293 = pneg %p189
        %p294 = pneg %p186
        %s295 = sand.u32 %s176, 1
        %s296 = scalar_lea.sflag [#allocation4], %s295
        %s297 = sand.u32 %s176, 1
        %s298 = smul.addr %s297, 4
        %s299 = scalar_lea.vmem [#allocation3], %s298
        %p300 = scmp.lt.s32.totalorder %s24, 1
        %s301 = scalar_select %p300, %s24, 1
        %p302 = scmp.lt.s32.totalorder %s25, 0
        %s303 = scalar_select %p302, %s25, 0
        %p304 = scmp.lt.s32.totalorder %s26, 0
        %s305 = scalar_select %p304, %s26, 0
        %s306 = sadd.s32 %s305, %s303
        %s307 = sadd.s32 %s306, %s301
        %s308 = smul.addr %s307, 2
        %s309 = scalar_lea.vmem %s0, %s308
        %s310 = smul.u32 16, %s26
        %p311 = scmp.lt.s32.totalorder %s24, 1
        %s312 = scalar_select %p311, %s24, 1
        %p313 = scmp.lt.s32.totalorder %s310, 15
        %s314 = scalar_select %p313, %s310, 15
        %s315 = smul.addr %s312, 16
        %s316 = sadd.s32 %s314, %s315
        %s317 = smul.addr %s316, 4
        %s318 = scalar_lea.vmem %s1, %s317
        %s319 = smul.u32 16, %s26
        %p320 = scmp.lt.s32.totalorder %s24, 1
        %s321 = scalar_select %p320, %s24, 1
        %p322 = scmp.lt.s32.totalorder %s25, 0
        %s323 = scalar_select %p322, %s25, 0
        %s324 = sadd.s32 %s323, %s321
        %s325 = smul.addr %s324, 4
        %s326 = scalar_lea.vmem %s2, %s325
        %p328 = scmp.eq.s32.totalorder %s26, 0
        // Predicated region
        $region41: #{geme_pooling.5} parent=39 // pred_check
          %p329 = pneg %p328
        $region42: #{geme_pooling.5} parent=39 // pred_check_branch
          %331 = sbr.rel (%p329) target = $region44
        $region43: #{geme_pooling.5} parent=39 // pred_region
          %vm332 = vcmask 125952
          %333 = vst.msk [vmem:[#allocation2] sm:$0xf] %vm332, 0.0
        $region44: #{geme_pooling.5} parent=39 // pred_fallthru
          _
        %v334 = vld [vmem:[#allocation2] sm:$0xf]
        %v335 = vld [vmem:[%s309] sm:$0x3]
        %v336 = vld [vmem:[%s318] sm:$0xf]
        %v337 = vld [vmem:[%s318 + $0x4] sm:$0xf]
        %v338 = vld [vmem:[%s318 + $0x8] sm:$0xf]
        %v339 = vld [vmem:[%s318 + $0xc] sm:$0xf]
        %v340 = vld [vmem:[%s318 + $0x10] sm:$0xf]
        %v341 = vld [vmem:[%s318 + $0x14] sm:$0xf]
        %v342 = vld [vmem:[%s318 + $0x18] sm:$0xf]
        %v343 = vld [vmem:[%s318 + $0x1c] sm:$0xf]
        %v344 = vld [vmem:[%s318 + $0x20] sm:$0xf]
        %v345 = vld [vmem:[%s318 + $0x24] sm:$0xf]
        %v346 = vld [vmem:[%s318 + $0x28] sm:$0xf]
        %v347 = vld [vmem:[%s318 + $0x2c] sm:$0xf]
        %v348 = vld [vmem:[%s318 + $0x30] sm:$0xf]
        %v349 = vld [vmem:[%s318 + $0x34] sm:$0xf]
        %v350 = vld [vmem:[%s318 + $0x38] sm:$0xf]
        %v351 = vld [vmem:[%s318 + $0x3c] sm:$0xf]
        %v368 = vunpack.c.l.b16 %v336
        %v369 = vunpack.c.l.b16 %v337
        %v370 = vunpack.c.l.b16 %v338
        %v371 = vunpack.c.l.b16 %v339
        %v372 = vunpack.c.l.b16 %v340
        %v373 = vunpack.c.l.b16 %v341
        %v374 = vunpack.c.l.b16 %v342
        %v375 = vunpack.c.l.b16 %v343
        %v376 = vunpack.c.l.b16 %v344
        %v377 = vunpack.c.l.b16 %v345
        %v378 = vunpack.c.l.b16 %v346
        %v379 = vunpack.c.l.b16 %v347
        %v380 = vunpack.c.l.b16 %v348
        %v381 = vunpack.c.l.b16 %v349
        %v382 = vunpack.c.l.b16 %v350
        %v383 = vunpack.c.l.b16 %v351
        %v384 = vpack.c.b16 %v369, %v368
        %v385 = vpack.c.b16 %v371, %v370
        %v386 = vpack.c.b16 %v373, %v372
        %v387 = vpack.c.b16 %v375, %v374
        %v388 = vpack.c.b16 %v377, %v376
        %v389 = vpack.c.b16 %v379, %v378
        %v390 = vpack.c.b16 %v381, %v380
        %v391 = vpack.c.b16 %v383, %v382
        %400 = vmatpush.bf16.msra.mxu0 %v391
        %401 = vmatpush.bf16.msra.mxu0 %v390
        %402 = vmatpush.bf16.msra.mxu0 %v389
        %403 = vmatpush.bf16.msra.mxu0 %v388
        %404 = vmatpush.bf16.msra.mxu0 %v387
        %405 = vmatpush.bf16.msra.mxu0 %v386
        %406 = vmatpush.bf16.msra.mxu0 %v385
        %407 = vmatpush.bf16.msra.mxu0 %v384
        %408 = vmatmul.bf16.gmra.mxu0 %v335
        %v409 = vpop.f32.mrf.mxu0
        %v410 = vadd.f32 0.0, %v409
        %v411 = vpop.f32.mrf.mxu0
        %412 = vdwg.mxu0
        %v413 = vadd.f32 %v334, %v410
        %vm414 = vcmask 125952
        %415 = vst.msk [vmem:[#allocation2] sm:$0xf] %vm414, %v413
        // Predicated region
        $region45: #{geme_pooling.5} parent=39 // pred_check
          %p416 = pneg %p328
        $region46: #{geme_pooling.5} parent=39 // pred_check_branch
          %418 = sbr.rel (%p416) target = $region48
        $region47: #{geme_pooling.5} parent=39 // pred_region
          %v419 = vld [vmem:[%s326] sm:$0xf]
          %v420 = vrcp.pop %v419
          %v421 = vld [vmem:[#allocation2] sm:$0xf]
          %423 = vset.pattern.permute.xlu0 0
          %424 = vperm.xlu0 %423, %v420
          %v425 = vpop.permute.xlu0 %424
          %v427 = vmul.f32 %v421, %v425
          %v428 = vsel %vm414, %v427, 0.0
          %429 = vadd.xlane.f32.xlu0 %v428
          %v430 = vpop.xlane.xlu0 %429
          %v431 = vrcp.pop 16.0
          %v432 = vmul.f32 16.0, %v431
          %v433 = vsub.f32 1.0, %v432
          %v434 = vmul.f32 %v431, %v433
          %v435 = vadd.f32 %v431, %v434
          %vm436 = vweird.f32 %v431
          %v437 = vsel %vm436, %v431, %v435
          %v438 = vmul.f32 %v430, %v437
          %v439 = vsub.f32 %v427, %v438
          %v440 = vmul.f32 %v439, %v439
          %v441 = vsel %vm414, %v440, 0.0
          %442 = vadd.xlane.f32.xlu0 %v441
          %v443 = vpop.xlane.xlu0 %442
          %v444 = vmul.f32 %v443, %v437
          %v445 = vadd.f32 %v444, 1e-06
          %v446 = vrsqrt.pop %v445
          %v447 = vmul.f32 %v446, %v445
          %v448 = vmul.f32 %v447, %v446
          %v449 = vmul.f32 0.5, %v448
          %v450 = vsub.f32 1.5, %v449
          %v451 = vmul.f32 %v446, %v450
          %vm452 = vweird.f32 %v445
          %vm453 = vweird.f32 %v446
          %vm454 = vmor %vm452, %vm453
          %v455 = vsel %vm454, %v446, %v451
          %v456 = vmul.f32 %v439, %v455
          %v457 = vld [vmem:[%s3] sm:$0x1]
          %v459 = vperm.slane %v457, 0
          %v461 = vmul.f32 %v456, %v459
          %v462 = vpack.c.bf16 %v461, %v461
          %v463 = vld [vmem:[%s4] sm:$0xf]
          %v464 = vld [vmem:[%s4 + $0x4] sm:$0xf]
          %v467 = vunpack.c.l.b16 %v463
          %v468 = vunpack.c.l.b16 %v464
          %v469 = vpack.c.b16 %v468, %v467
          %vm471 = vcmask 130048
          %v473 = vsel %vm471, %v462, 0
          %475 = vmatpush.bf16.msra.mxu0 0
          %476 = vmatpush.bf16.msra.mxu0 0
          %477 = vmatpush.bf16.msra.mxu0 0
          %478 = vmatpush.bf16.msra.mxu0 0
          %479 = vmatpush.bf16.msra.mxu0 0
          %480 = vmatpush.bf16.msra.mxu0 0
          %481 = vmatpush.bf16.msra.mxu0 0
          %482 = vmatpush.bf16.msra.mxu0 %v469
          %483 = vmatmul.bf16.gmra.mxu0 %v473
          %v484 = vpop.f32.mrf.mxu0
          %v485 = vadd.f32 0.0, %v484
          %v486 = vpop.f32.mrf.mxu0
          %487 = vdwg.mxu0
          %vm488 = vcmask 257024
          %489 = vst.msk [vmem:[%s299] sm:$0xf] %vm488, %v485
        $region48: #{geme_pooling.5} parent=39 // pred_fallthru
          _
        %s490 = sand.u32 %s176, 1
        %s491 = scalar_lea.sflag [#allocation4], %s490
        %s492 = sand.u32 %s176, 1
        %s493 = smul.addr %s492, 4
        %s494 = scalar_lea.vmem [#allocation3], %s493
        // Predicated region
        $region49: #{geme_pooling.5} parent=39 // pred_check
          %p495 = pneg %p186
        $region50: #{geme_pooling.5} parent=39 // pred_check_branch
          %497 = sbr.rel (%p495) target = $region52
        $region51: #{geme_pooling.5} parent=39 // pred_region
          %499 = vsyncadd %s491, 0
          %s500 = sadd.s32 %s25, %s24
          %s501 = smul.addr %s500, 4
          %s502 = scalar_lea.hbm %s5, %s501
          %s504 = sshll.u32 %s494, 4
          %s505 = int_to_ptr.vmem [resolvable:$true] %s504
          %s506 = sshll.u32 %s502, 4
          %s507 = int_to_ptr.hbm [resolvable:$true] %s506
          %509 = dma.vmem_to_hbm [thread:$0]  %s505, 64, %s507, %s491
        $region52: #{geme_pooling.5} parent=39 // pred_fallthru
          _
      $region40: #{geme_pooling.5} parent=5 // pred_fallthru
        _
      %p510 = scmp.le.s32.totalorder 2, %s14
      // Predicated region
      $region53: #{geme_pooling.5} parent=5 // pred_check
        %p511 = pneg %p510
      $region54: #{geme_pooling.5} parent=5 // pred_check_branch
        %513 = sbr.rel (%p511) target = $region56
      $region55: #{geme_pooling.5} parent=5 // pred_region
        %s514 = ssub.s32 %s14, 2
        // Predicated region
        $region57: #{geme_pooling.5} parent=55 // pred_check
          %p515 = pneg %p192
        $region58: #{geme_pooling.5} parent=55 // pred_check_branch
          %517 = sbr.rel (%p515) target = $region60
        $region59: #{geme_pooling.5} parent=55 // pred_region
          %s518 = sand.u32 %s177, 1
          %s519 = scalar_lea.sflag [#allocation4], %s518
          %s520 = sand.u32 %s177, 1
          %s521 = smul.addr %s520, 4
          %s522 = scalar_lea.vmem [#allocation3], %s521
          %524 = dma.done %s519, 64
        $region60: #{geme_pooling.5} parent=55 // pred_fallthru
          _
      $region56: #{geme_pooling.5} parent=5 // pred_fallthru
        _
    $region6: #{geme_pooling.5} parent=1 // loop_footer
      %s18 = sadd.s32 1, %s14
    $region7: #{geme_pooling.5} parent=1 // loop_footer_branch
      %13 = sbr.rel target = $region3
    $region8: #{geme_pooling.5} parent=1 // loop_exit
      _
    %525 = vsyncpa [#allocation4], 1
    %s526 = scalar_lea.sflag [#allocation4], 1
    %527 = vsyncpa %s526, 1

</llo_original>
